<compile_context>
chip_gen: v7x
topology: tpu7x:2x2x1
jax: 0.10.0
libtpu: 0.0.40
codegen_flags: <defaults>
</compile_context>

<pallas_src>
import jax
import jax.numpy as jnp
from jax.experimental import pallas as pl
from jax.experimental.pallas import tpu as pltpu


HIDDEN = 256
BOTTLENECK = 20
LANE = 128
SUBLANE = 8
TM_TARGET = 2048          # batch tile target (rows per grid step); multiple of 8


def _round_up(x, m):
    return ((x + m - 1) // m) * m


def _pad_to(x, shape):
    pads = [(0, t - c) for c, t in zip(x.shape, shape)]
    if all(p == (0, 0) for p in pads):
        return x
    return jnp.pad(x, pads)


def _autoenc_kernel(
    s_ref,
    we0_ref, be0_ref, we1_ref, be1_ref, we2_ref, be2_ref, we3_ref, be3_ref,
    wd0_ref, bd0_ref, wd1_ref, bd1_ref, wd2_ref, bd2_ref, wd3_ref, bd3_ref,
    out_ref,
):
    cd = we0_ref.dtype  # MXU operand ("compute") dtype; accumulation stays f32

    def linear(h, w_ref, b_ref):
        # MXU matmul with f32 accumulation; bias add in f32.
        return jnp.dot(h, w_ref[...], preferred_element_type=jnp.float32) + b_ref[...]

    def relu_cd(a_f32):
        # ReLU in f32, then a single cast per layer so inter-layer activations
        # are carried in the compute dtype (halves VMEM vst/vld traffic).
        return jnp.maximum(a_f32, 0.0).astype(cd)

    x = s_ref[...].astype(cd)

    # ----- Encoder -----
    h = relu_cd(linear(x, we0_ref, be0_ref))
    h = relu_cd(linear(h, we1_ref, be1_ref))
    h = relu_cd(linear(h, we2_ref, be2_ref))
    z = relu_cd(linear(h, we3_ref, be3_ref))   # F.relu applied to the bottleneck in forward()

    # ----- Decoder -----
    h = relu_cd(linear(z, wd0_ref, bd0_ref))
    h = relu_cd(linear(h, wd1_ref, bd1_ref))
    h = relu_cd(linear(h, wd2_ref, bd2_ref))
    y = jnp.tanh(linear(h, wd3_ref, bd3_ref))

    out_ref[...] = y.astype(out_ref.dtype)


def autoenc_forward(s, params, *, compute_dtype=jnp.bfloat16, tm_target=TM_TARGET):
    """Fused autoencoder forward pass.

    s:      (B, D) float32
    params: flat tuple of 16 arrays (8 weights (in, out), 8 biases (1, out)),
            in module order ENC then DEC.
    compute_dtype: MXU operand dtype (bf16 on all TPU generations; f32 to opt out).
    """
    B, D = s.shape
    (we0, be0, we1, be1, we2, be2, we3, be3,
     wd0, bd0, wd1, bd1, wd2, bd2, wd3, bd3) = params
    hid = we0.shape[1]
    bott = we3.shape[1]

    # One-time lane-dense padding of the narrow bottleneck only (tiny weights).
    # Zero pads are correctness-neutral: padded z columns = ReLU(0 + 0) = 0 and
    # hit zero rows of wd0, contributing nothing.
    z_pad = _round_up(bott, LANE)
    we3 = _pad_to(we3, (hid, z_pad))
    be3 = _pad_to(be3, (1, z_pad))
    wd0 = _pad_to(wd0, (z_pad, hid))

    weights = [we0, we1, we2, we3, wd0, wd1, wd2, wd3]
    biases = [be0, be1, be2, be3, bd0, bd1, bd2, bd3]
    weights = [w.astype(compute_dtype) for w in weights]   # bf16 MXU operands everywhere
    biases = [b.astype(jnp.float32) for b in biases]       # bias add stays f32

    flat_params = []
    for w, b in zip(weights, biases):
        flat_params.extend([w, b])

    # --- batch tiling ---
    # Large tile amortizes weight pushes + per-step pipeline overhead, but always
    # aim for >= 2 grid steps when B allows it so both v7x TensorCores get work.
    tm = max(SUBLANE, min(tm_target, _round_up(pl.cdiv(B, 2), SUBLANE)))
    grid = (pl.cdiv(B, tm),)   # ragged last block is masked by Pallas

    # I/O streamed un-padded: last block dim equals the full array dim D, so the
    # (8,128) rule is satisfied and no wrapper pad/slice HBM passes are needed.
    s_spec = pl.BlockSpec((tm, D), lambda i: (i, 0))
    out_spec = pl.BlockSpec((tm, D), lambda i: (i, 0))
    # Weights/biases: full-array blocks with constant index_map -> DMA'd once,
    # VMEM-resident across the whole grid.
    param_specs = [pl.BlockSpec(p.shape, lambda i: (0, 0)) for p in flat_params]

    # VMEM budget: resident params (double-buffered) + streamed I/O tiles + a
    # generous allowance for live f32 intermediates; capped at 48 MiB for v7x.
    param_bytes = sum(int(p.size) * p.dtype.itemsize for p in flat_params)
    io_bytes = 2 * 2 * (tm * D * 4)            # double-buffered input + output tiles
    act_bytes = 8 * tm * hid * 4               # generous live (tm, hid) f32 temporaries
    vmem_limit = int(min(max(2 * param_bytes + io_bytes + act_bytes + (8 << 20),
                             32 << 20), 48 << 20))

    return pl.pallas_call(
        _autoenc_kernel,
        out_shape=jax.ShapeDtypeStruct((B, D), jnp.float32),
        grid=grid,
        in_specs=[s_spec] + param_specs,
        out_specs=out_spec,
        compiler_params=pltpu.CompilerParams(
            dimension_semantics=("parallel",),
            vmem_limit_bytes=vmem_limit,
        ),
    )(s, *flat_params)


def init_params(key, input_size, hidden=HIDDEN, bottleneck=BOTTLENECK):
    """Deterministic synthetic parameter init matching the module's layer shapes."""
    sizes = [
        # encoder
        (input_size, hidden), (hidden, hidden), (hidden, hidden), (hidden, bottleneck),
        # decoder
        (bottleneck, hidden), (hidden, hidden), (hidden, hidden), (hidden, input_size),
    ]
    params = []
    for i, (fan_in, fan_out) in enumerate(sizes):
        kw, kb, key = jax.random.split(jax.random.fold_in(key, i), 3)
        scale = 1.0 / jnp.sqrt(jnp.float32(fan_in))
        w = jax.random.uniform(kw, (fan_in, fan_out), jnp.float32, -scale, scale)
        b = jax.random.uniform(kb, (1, fan_out), jnp.float32, -scale, scale)
        params.extend([w, b])
    return tuple(params)


def reference_forward(s, params, compute_dtype=jnp.bfloat16):
    """Pure-JAX reference (same operand dtype / f32 accumulation as the kernel)."""
    (we0, be0, we1, be1, we2, be2, we3, be3,
     wd0, bd0, wd1, bd1, wd2, bd2, wd3, bd3) = params

    def lin(h, w, b):
        return jnp.dot(h.astype(compute_dtype), w.astype(compute_dtype),
                       preferred_element_type=jnp.float32) + b

    h = jnp.maximum(lin(s, we0, be0), 0.0)
    h = jnp.maximum(lin(h, we1, be1), 0.0)
    h = jnp.maximum(lin(h, we2, be2), 0.0)
    z = jnp.maximum(lin(h, we3, be3), 0.0)
    h = jnp.maximum(lin(z, wd0, bd0), 0.0)
    h = jnp.maximum(lin(h, wd1, bd1), 0.0)
    h = jnp.maximum(lin(h, wd2, bd2), 0.0)
    return jnp.tanh(lin(h, wd3, bd3))


if __name__ == "__main__":
    key = jax.random.PRNGKey(0)
    observation_space = 32  # input_size

    k_s, k_p = jax.random.split(key)
    params = init_params(k_p, observation_space)

    # Two small cases: tile-aligned batch, and a ragged multi-step grid
    # (exercises the no-pad path where Pallas masks the last batch block).
    for batch in (8, 50):
        s = jax.random.normal(jax.random.fold_in(k_s, batch),
                              (batch, observation_space), dtype=jnp.float32)
        out = jax.block_until_ready(autoenc_forward(s, params))
        ref = reference_forward(s, params)
        assert out.shape == (batch, observation_space)
        assert jnp.allclose(out, ref, atol=5e-3, rtol=5e-3), \
            f"Pallas output mismatch vs reference (batch={batch})"

    print("KERNEL_OK")
</pallas_src>

<mosaic_0001>
module attributes {stable_mosaic.version = 11 : i64} {
  func.func @_autoenc_kernel(%arg0: i32, %arg1: memref<8x32xf32, #tpu.memory_space<vmem>>, %arg2: memref<32x256xbf16, #tpu.memory_space<vmem>>, %arg3: memref<1x256xf32, #tpu.memory_space<vmem>>, %arg4: memref<256x256xbf16, #tpu.memory_space<vmem>>, %arg5: memref<1x256xf32, #tpu.memory_space<vmem>>, %arg6: memref<256x256xbf16, #tpu.memory_space<vmem>>, %arg7: memref<1x256xf32, #tpu.memory_space<vmem>>, %arg8: memref<256x128xbf16, #tpu.memory_space<vmem>>, %arg9: memref<1x128xf32, #tpu.memory_space<vmem>>, %arg10: memref<128x256xbf16, #tpu.memory_space<vmem>>, %arg11: memref<1x256xf32, #tpu.memory_space<vmem>>, %arg12: memref<256x256xbf16, #tpu.memory_space<vmem>>, %arg13: memref<1x256xf32, #tpu.memory_space<vmem>>, %arg14: memref<256x256xbf16, #tpu.memory_space<vmem>>, %arg15: memref<1x256xf32, #tpu.memory_space<vmem>>, %arg16: memref<256x32xbf16, #tpu.memory_space<vmem>>, %arg17: memref<1x32xf32, #tpu.memory_space<vmem>>, %arg18: memref<8x32xf32, #tpu.memory_space<vmem>>) attributes {dimension_semantics = [#tpu.dimension_semantics<parallel>], iteration_bounds = array<i64: 1>, scalar_prefetch = 0 : i64, scratch_operands = 0 : i64, tpu.core_type = #tpu.core_type<tc>, window_params = [{transform_indices = @transform_0, window_bounds = array<i64: 8, 32>}, {pipeline_mode = #tpu.pipeline_mode<synchronous>, transform_indices = @transform_1, window_bounds = array<i64: 32, 256>}, {pipeline_mode = #tpu.pipeline_mode<synchronous>, transform_indices = @transform_2, window_bounds = array<i64: 1, 256>}, {pipeline_mode = #tpu.pipeline_mode<synchronous>, transform_indices = @transform_3, window_bounds = array<i64: 256, 256>}, {pipeline_mode = #tpu.pipeline_mode<synchronous>, transform_indices = @transform_4, window_bounds = array<i64: 1, 256>}, {pipeline_mode = #tpu.pipeline_mode<synchronous>, transform_indices = @transform_5, window_bounds = array<i64: 256, 256>}, {pipeline_mode = #tpu.pipeline_mode<synchronous>, transform_indices = @transform_6, window_bounds = array<i64: 1, 256>}, {pipeline_mode = #tpu.pipeline_mode<synchronous>, transform_indices = @transform_7, window_bounds = array<i64: 256, 128>}, {pipeline_mode = #tpu.pipeline_mode<synchronous>, transform_indices = @transform_8, window_bounds = array<i64: 1, 128>}, {pipeline_mode = #tpu.pipeline_mode<synchronous>, transform_indices = @transform_9, window_bounds = array<i64: 128, 256>}, {pipeline_mode = #tpu.pipeline_mode<synchronous>, transform_indices = @transform_10, window_bounds = array<i64: 1, 256>}, {pipeline_mode = #tpu.pipeline_mode<synchronous>, transform_indices = @transform_11, window_bounds = array<i64: 256, 256>}, {pipeline_mode = #tpu.pipeline_mode<synchronous>, transform_indices = @transform_12, window_bounds = array<i64: 1, 256>}, {pipeline_mode = #tpu.pipeline_mode<synchronous>, transform_indices = @transform_13, window_bounds = array<i64: 256, 256>}, {pipeline_mode = #tpu.pipeline_mode<synchronous>, transform_indices = @transform_14, window_bounds = array<i64: 1, 256>}, {pipeline_mode = #tpu.pipeline_mode<synchronous>, transform_indices = @transform_15, window_bounds = array<i64: 256, 32>}, {pipeline_mode = #tpu.pipeline_mode<synchronous>, transform_indices = @transform_16, window_bounds = array<i64: 1, 32>}, {transform_indices = @transform_17, window_bounds = array<i64: 8, 32>}]} {
    %c0 = arith.constant 0 : index
    %c0_0 = arith.constant 0 : index
    %0 = vector.load %arg1[%c0, %c0_0] : memref<8x32xf32, #tpu.memory_space<vmem>>, vector<8x32xf32>
    %1 = arith.truncf %0 : vector<8x32xf32> to vector<8x32xbf16>
    %c0_1 = arith.constant 0 : index
    %c0_2 = arith.constant 0 : index
    %2 = vector.load %arg2[%c0_1, %c0_2] : memref<32x256xbf16, #tpu.memory_space<vmem>>, vector<32x256xbf16>
    %cst = arith.constant dense<0.000000e+00> : vector<8x256xf32>
    %3 = tpu.matmul %1, %2, %cst {dimension_numbers = #tpu.dot_dimension_numbers<[1], [0], [0], [1], [0, 0, 1, 1], [], []>} : vector<8x32xbf16>, vector<32x256xbf16>, vector<8x256xf32> -> vector<8x256xf32>
    %c0_3 = arith.constant 0 : index
    %c0_4 = arith.constant 0 : index
    %4 = vector.load %arg3[%c0_3, %c0_4] : memref<1x256xf32, #tpu.memory_space<vmem>>, vector<1x256xf32>
    %5 = vector.broadcast %4 : vector<1x256xf32> to vector<8x256xf32>
    %6 = arith.addf %3, %5 : vector<8x256xf32>
    %cst_5 = arith.constant 0.000000e+00 : f32
    %7 = vector.broadcast %cst_5 : f32 to vector<8x256xf32>
    %8 = arith.maximumf %6, %7 : vector<8x256xf32>
    %9 = arith.truncf %8 : vector<8x256xf32> to vector<8x256xbf16>
    %c0_6 = arith.constant 0 : index
    %c0_7 = arith.constant 0 : index
    %10 = vector.load %arg4[%c0_6, %c0_7] : memref<256x256xbf16, #tpu.memory_space<vmem>>, vector<256x256xbf16>
    %cst_8 = arith.constant dense<0.000000e+00> : vector<8x256xf32>
    %11 = tpu.matmul %9, %10, %cst_8 {dimension_numbers = #tpu.dot_dimension_numbers<[1], [0], [0], [1], [0, 0, 1, 1], [], []>} : vector<8x256xbf16>, vector<256x256xbf16>, vector<8x256xf32> -> vector<8x256xf32>
    %c0_9 = arith.constant 0 : index
    %c0_10 = arith.constant 0 : index
    %12 = vector.load %arg5[%c0_9, %c0_10] : memref<1x256xf32, #tpu.memory_space<vmem>>, vector<1x256xf32>
    %13 = vector.broadcast %12 : vector<1x256xf32> to vector<8x256xf32>
    %14 = arith.addf %11, %13 : vector<8x256xf32>
    %cst_11 = arith.constant 0.000000e+00 : f32
    %15 = vector.broadcast %cst_11 : f32 to vector<8x256xf32>
    %16 = arith.maximumf %14, %15 : vector<8x256xf32>
    %17 = arith.truncf %16 : vector<8x256xf32> to vector<8x256xbf16>
    %c0_12 = arith.constant 0 : index
    %c0_13 = arith.constant 0 : index
    %18 = vector.load %arg6[%c0_12, %c0_13] : memref<256x256xbf16, #tpu.memory_space<vmem>>, vector<256x256xbf16>
    %cst_14 = arith.constant dense<0.000000e+00> : vector<8x256xf32>
    %19 = tpu.matmul %17, %18, %cst_14 {dimension_numbers = #tpu.dot_dimension_numbers<[1], [0], [0], [1], [0, 0, 1, 1], [], []>} : vector<8x256xbf16>, vector<256x256xbf16>, vector<8x256xf32> -> vector<8x256xf32>
    %c0_15 = arith.constant 0 : index
    %c0_16 = arith.constant 0 : index
    %20 = vector.load %arg7[%c0_15, %c0_16] : memref<1x256xf32, #tpu.memory_space<vmem>>, vector<1x256xf32>
    %21 = vector.broadcast %20 : vector<1x256xf32> to vector<8x256xf32>
    %22 = arith.addf %19, %21 : vector<8x256xf32>
    %cst_17 = arith.constant 0.000000e+00 : f32
    %23 = vector.broadcast %cst_17 : f32 to vector<8x256xf32>
    %24 = arith.maximumf %22, %23 : vector<8x256xf32>
    %25 = arith.truncf %24 : vector<8x256xf32> to vector<8x256xbf16>
    %c0_18 = arith.constant 0 : index
    %c0_19 = arith.constant 0 : index
    %26 = vector.load %arg8[%c0_18, %c0_19] : memref<256x128xbf16, #tpu.memory_space<vmem>>, vector<256x128xbf16>
    %cst_20 = arith.constant dense<0.000000e+00> : vector<8x128xf32>
    %27 = tpu.matmul %25, %26, %cst_20 {dimension_numbers = #tpu.dot_dimension_numbers<[1], [0], [0], [1], [0, 0, 1, 1], [], []>} : vector<8x256xbf16>, vector<256x128xbf16>, vector<8x128xf32> -> vector<8x128xf32>
    %c0_21 = arith.constant 0 : index
    %c0_22 = arith.constant 0 : index
    %28 = vector.load %arg9[%c0_21, %c0_22] : memref<1x128xf32, #tpu.memory_space<vmem>>, vector<1x128xf32>
    %29 = vector.broadcast %28 : vector<1x128xf32> to vector<8x128xf32>
    %30 = arith.addf %27, %29 : vector<8x128xf32>
    %cst_23 = arith.constant 0.000000e+00 : f32
    %31 = vector.broadcast %cst_23 : f32 to vector<8x128xf32>
    %32 = arith.maximumf %30, %31 : vector<8x128xf32>
    %33 = arith.truncf %32 : vector<8x128xf32> to vector<8x128xbf16>
    %c0_24 = arith.constant 0 : index
    %c0_25 = arith.constant 0 : index
    %34 = vector.load %arg10[%c0_24, %c0_25] : memref<128x256xbf16, #tpu.memory_space<vmem>>, vector<128x256xbf16>
    %cst_26 = arith.constant dense<0.000000e+00> : vector<8x256xf32>
    %35 = tpu.matmul %33, %34, %cst_26 {dimension_numbers = #tpu.dot_dimension_numbers<[1], [0], [0], [1], [0, 0, 1, 1], [], []>} : vector<8x128xbf16>, vector<128x256xbf16>, vector<8x256xf32> -> vector<8x256xf32>
    %c0_27 = arith.constant 0 : index
    %c0_28 = arith.constant 0 : index
    %36 = vector.load %arg11[%c0_27, %c0_28] : memref<1x256xf32, #tpu.memory_space<vmem>>, vector<1x256xf32>
    %37 = vector.broadcast %36 : vector<1x256xf32> to vector<8x256xf32>
    %38 = arith.addf %35, %37 : vector<8x256xf32>
    %cst_29 = arith.constant 0.000000e+00 : f32
    %39 = vector.broadcast %cst_29 : f32 to vector<8x256xf32>
    %40 = arith.maximumf %38, %39 : vector<8x256xf32>
    %41 = arith.truncf %40 : vector<8x256xf32> to vector<8x256xbf16>
    %c0_30 = arith.constant 0 : index
    %c0_31 = arith.constant 0 : index
    %42 = vector.load %arg12[%c0_30, %c0_31] : memref<256x256xbf16, #tpu.memory_space<vmem>>, vector<256x256xbf16>
    %cst_32 = arith.constant dense<0.000000e+00> : vector<8x256xf32>
    %43 = tpu.matmul %41, %42, %cst_32 {dimension_numbers = #tpu.dot_dimension_numbers<[1], [0], [0], [1], [0, 0, 1, 1], [], []>} : vector<8x256xbf16>, vector<256x256xbf16>, vector<8x256xf32> -> vector<8x256xf32>
    %c0_33 = arith.constant 0 : index
    %c0_34 = arith.constant 0 : index
    %44 = vector.load %arg13[%c0_33, %c0_34] : memref<1x256xf32, #tpu.memory_space<vmem>>, vector<1x256xf32>
    %45 = vector.broadcast %44 : vector<1x256xf32> to vector<8x256xf32>
    %46 = arith.addf %43, %45 : vector<8x256xf32>
    %cst_35 = arith.constant 0.000000e+00 : f32
    %47 = vector.broadcast %cst_35 : f32 to vector<8x256xf32>
    %48 = arith.maximumf %46, %47 : vector<8x256xf32>
    %49 = arith.truncf %48 : vector<8x256xf32> to vector<8x256xbf16>
    %c0_36 = arith.constant 0 : index
    %c0_37 = arith.constant 0 : index
    %50 = vector.load %arg14[%c0_36, %c0_37] : memref<256x256xbf16, #tpu.memory_space<vmem>>, vector<256x256xbf16>
    %cst_38 = arith.constant dense<0.000000e+00> : vector<8x256xf32>
    %51 = tpu.matmul %49, %50, %cst_38 {dimension_numbers = #tpu.dot_dimension_numbers<[1], [0], [0], [1], [0, 0, 1, 1], [], []>} : vector<8x256xbf16>, vector<256x256xbf16>, vector<8x256xf32> -> vector<8x256xf32>
    %c0_39 = arith.constant 0 : index
    %c0_40 = arith.constant 0 : index
    %52 = vector.load %arg15[%c0_39, %c0_40] : memref<1x256xf32, #tpu.memory_space<vmem>>, vector<1x256xf32>
    %53 = vector.broadcast %52 : vector<1x256xf32> to vector<8x256xf32>
    %54 = arith.addf %51, %53 : vector<8x256xf32>
    %cst_41 = arith.constant 0.000000e+00 : f32
    %55 = vector.broadcast %cst_41 : f32 to vector<8x256xf32>
    %56 = arith.maximumf %54, %55 : vector<8x256xf32>
    %57 = arith.truncf %56 : vector<8x256xf32> to vector<8x256xbf16>
    %c0_42 = arith.constant 0 : index
    %c0_43 = arith.constant 0 : index
    %58 = vector.load %arg16[%c0_42, %c0_43] : memref<256x32xbf16, #tpu.memory_space<vmem>>, vector<256x32xbf16>
    %cst_44 = arith.constant dense<0.000000e+00> : vector<8x32xf32>
    %59 = tpu.matmul %57, %58, %cst_44 {dimension_numbers = #tpu.dot_dimension_numbers<[1], [0], [0], [1], [0, 0, 1, 1], [], []>} : vector<8x256xbf16>, vector<256x32xbf16>, vector<8x32xf32> -> vector<8x32xf32>
    %c0_45 = arith.constant 0 : index
    %c0_46 = arith.constant 0 : index
    %60 = vector.load %arg17[%c0_45, %c0_46] : memref<1x32xf32, #tpu.memory_space<vmem>>, vector<1x32xf32>
    %61 = vector.broadcast %60 : vector<1x32xf32> to vector<8x32xf32>
    %62 = arith.addf %59, %61 : vector<8x32xf32>
    %63 = math.tanh %62 : vector<8x32xf32>
    %c0_47 = arith.constant 0 : index
    %c0_48 = arith.constant 0 : index
    %64 = vector.load %arg18[%c0_47, %c0_48] : memref<8x32xf32, #tpu.memory_space<vmem>>, vector<8x32xf32>
    tpu.vector_store %arg18[%c0_47, %c0_48], %63 {strides = array<i32>} : memref<8x32xf32, #tpu.memory_space<vmem>>, vector<8x32xf32>,
    return
  }
  func.func @transform_0(%arg0: i32) -> (i32, i32) {
    %c0_i32 = arith.constant 0 : i32
    %c0_i32_0 = arith.constant 0 : i32
    return %arg0, %c0_i32 : i32, i32
  }
  func.func @transform_1(%arg0: i32) -> (i32, i32) {
    %c0_i32 = arith.constant 0 : i32
    %c0_i32_0 = arith.constant 0 : i32
    %c0_i32_1 = arith.constant 0 : i32
    return %c0_i32, %c0_i32_0 : i32, i32
  }
  func.func @transform_2(%arg0: i32) -> (i32, i32) {
    %c0_i32 = arith.constant 0 : i32
    %c0_i32_0 = arith.constant 0 : i32
    %c0_i32_1 = arith.constant 0 : i32
    return %c0_i32, %c0_i32_0 : i32, i32
  }
  func.func @transform_3(%arg0: i32) -> (i32, i32) {
    %c0_i32 = arith.constant 0 : i32
    %c0_i32_0 = arith.constant 0 : i32
    %c0_i32_1 = arith.constant 0 : i32
    return %c0_i32, %c0_i32_0 : i32, i32
  }
  func.func @transform_4(%arg0: i32) -> (i32, i32) {
    %c0_i32 = arith.constant 0 : i32
    %c0_i32_0 = arith.constant 0 : i32
    %c0_i32_1 = arith.constant 0 : i32
    return %c0_i32, %c0_i32_0 : i32, i32
  }
  func.func @transform_5(%arg0: i32) -> (i32, i32) {
    %c0_i32 = arith.constant 0 : i32
    %c0_i32_0 = arith.constant 0 : i32
    %c0_i32_1 = arith.constant 0 : i32
    return %c0_i32, %c0_i32_0 : i32, i32
  }
  func.func @transform_6(%arg0: i32) -> (i32, i32) {
    %c0_i32 = arith.constant 0 : i32
    %c0_i32_0 = arith.constant 0 : i32
    %c0_i32_1 = arith.constant 0 : i32
    return %c0_i32, %c0_i32_0 : i32, i32
  }
  func.func @transform_7(%arg0: i32) -> (i32, i32) {
    %c0_i32 = arith.constant 0 : i32
    %c0_i32_0 = arith.constant 0 : i32
    %c0_i32_1 = arith.constant 0 : i32
    return %c0_i32, %c0_i32_0 : i32, i32
  }
  func.func @transform_8(%arg0: i32) -> (i32, i32) {
    %c0_i32 = arith.constant 0 : i32
    %c0_i32_0 = arith.constant 0 : i32
    %c0_i32_1 = arith.constant 0 : i32
    return %c0_i32, %c0_i32_0 : i32, i32
  }
  func.func @transform_9(%arg0: i32) -> (i32, i32) {
    %c0_i32 = arith.constant 0 : i32
    %c0_i32_0 = arith.constant 0 : i32
    %c0_i32_1 = arith.constant 0 : i32
    return %c0_i32, %c0_i32_0 : i32, i32
  }
  func.func @transform_10(%arg0: i32) -> (i32, i32) {
    %c0_i32 = arith.constant 0 : i32
    %c0_i32_0 = arith.constant 0 : i32
    %c0_i32_1 = arith.constant 0 : i32
    return %c0_i32, %c0_i32_0 : i32, i32
  }
  func.func @transform_11(%arg0: i32) -> (i32, i32) {
    %c0_i32 = arith.constant 0 : i32
    %c0_i32_0 = arith.constant 0 : i32
    %c0_i32_1 = arith.constant 0 : i32
    return %c0_i32, %c0_i32_0 : i32, i32
  }
  func.func @transform_12(%arg0: i32) -> (i32, i32) {
    %c0_i32 = arith.constant 0 : i32
    %c0_i32_0 = arith.constant 0 : i32
    %c0_i32_1 = arith.constant 0 : i32
    return %c0_i32, %c0_i32_0 : i32, i32
  }
  func.func @transform_13(%arg0: i32) -> (i32, i32) {
    %c0_i32 = arith.constant 0 : i32
    %c0_i32_0 = arith.constant 0 : i32
    %c0_i32_1 = arith.constant 0 : i32
    return %c0_i32, %c0_i32_0 : i32, i32
  }
  func.func @transform_14(%arg0: i32) -> (i32, i32) {
    %c0_i32 = arith.constant 0 : i32
    %c0_i32_0 = arith.constant 0 : i32
    %c0_i32_1 = arith.constant 0 : i32
    return %c0_i32, %c0_i32_0 : i32, i32
  }
  func.func @transform_15(%arg0: i32) -> (i32, i32) {
    %c0_i32 = arith.constant 0 : i32
    %c0_i32_0 = arith.constant 0 : i32
    %c0_i32_1 = arith.constant 0 : i32
    return %c0_i32, %c0_i32_0 : i32, i32
  }
  func.func @transform_16(%arg0: i32) -> (i32, i32) {
    %c0_i32 = arith.constant 0 : i32
    %c0_i32_0 = arith.constant 0 : i32
    %c0_i32_1 = arith.constant 0 : i32
    return %c0_i32, %c0_i32_0 : i32, i32
  }
  func.func @transform_17(%arg0: i32) -> (i32, i32) {
    %c0_i32 = arith.constant 0 : i32
    %c0_i32_0 = arith.constant 0 : i32
    return %arg0, %c0_i32 : i32, i32
  }
}

</mosaic_0001>

<llo_original>
// kernel: tpu_custom_call.1
$region0: #{tpu_custom_call.1}
  #allocation0 [shape = 'u32[]', space=smem, size = 0x4, offset = 0x4, fixed_abs, tag = 'smem constant byte address 0x4 - core index']
  #allocation1 [shape = 'u32[144,128]{1,0:T(1,128)}', space=vmem, size = 0x12000, scoped, tag = 'internal scratch']
  %s0 = inlined_call_operand.vmem [shape: f32[8,32], index: 0, kind: input, shape index: {}]
  %s1 = inlined_call_operand.vmem [shape: bf16[32,256], index: 1, kind: input, shape index: {}]
  %s2 = inlined_call_operand.vmem [shape: f32[1,256], index: 2, kind: input, shape index: {}]
  %s3 = inlined_call_operand.hbm [shape: bf16[256,256], index: 3, kind: input, shape index: {}]
  %s4 = inlined_call_operand.vmem [shape: f32[1,256], index: 4, kind: input, shape index: {}]
  %s5 = inlined_call_operand.hbm [shape: bf16[256,256], index: 5, kind: input, shape index: {}]
  %s6 = inlined_call_operand.vmem [shape: f32[1,256], index: 6, kind: input, shape index: {}]
  %s7 = inlined_call_operand.vmem [shape: bf16[256,128], index: 7, kind: input, shape index: {}]
  %s8 = inlined_call_operand.vmem [shape: f32[1,128], index: 8, kind: input, shape index: {}]
  %s9 = inlined_call_operand.hbm [shape: bf16[128,256], index: 9, kind: input, shape index: {}]
  %s10 = inlined_call_operand.vmem [shape: f32[1,256], index: 10, kind: input, shape index: {}]
  %s11 = inlined_call_operand.hbm [shape: bf16[256,256], index: 11, kind: input, shape index: {}]
  %s12 = inlined_call_operand.vmem [shape: f32[1,256], index: 12, kind: input, shape index: {}]
  %s13 = inlined_call_operand.hbm [shape: bf16[256,256], index: 13, kind: input, shape index: {}]
  %s14 = inlined_call_operand.vmem [shape: f32[1,256], index: 14, kind: input, shape index: {}]
  %s15 = inlined_call_operand.vmem [shape: bf16[256,32], index: 15, kind: input, shape index: {}]
  %s16 = inlined_call_operand.vmem [shape: f32[1,32], index: 16, kind: input, shape index: {}]
  %s17 = inlined_call_operand.hbm [shape: f32[8,32], index: 17, kind: output, shape index: {}]
  %s18 = sld [smem:[#allocation0]]
  $region98: #{tpu_custom_call.1} parent=0
    _
  %s20 = ssub.s32 1, %s18
  %s21 = scalar_select 0, %s20, %s18
  $region1: #{tpu_custom_call.1} parent=0
    #allocation2 [shape = 'u8[131072]{0}', space=vmem, size = 0x20000, scoped, tag = 'input window, operand 3, single buffered']
    #allocation3 [shape = 's32[1]{0}', space=sflag, size = 0x4, scoped, tag = 'scoped memory for tpu_custom_call.1']
    #allocation4 [shape = 's32[1]{0}', space=sflag, size = 0x4, scoped, tag = 'scoped memory for tpu_custom_call.1']
    #allocation5 [shape = 'u8[131072]{0}', space=vmem, size = 0x20000, scoped, tag = 'input window, operand 5, single buffered']
    #allocation6 [shape = 's32[1]{0}', space=sflag, size = 0x4, scoped, tag = 'scoped memory for tpu_custom_call.1']
    #allocation7 [shape = 'u8[65536]{0}', space=vmem, size = 0x10000, scoped, tag = 'input window, operand 9, single buffered']
    #allocation8 [shape = 'u8[131072]{0}', space=vmem, size = 0x20000, scoped, tag = 'input window, operand 11, single buffered']
    #allocation9 [shape = 's32[1]{0}', space=sflag, size = 0x4, scoped, tag = 'scoped memory for tpu_custom_call.1']
    #allocation10 [shape = 'u8[131072]{0}', space=vmem, size = 0x20000, scoped, tag = 'input window, operand 13, single buffered']
    #allocation11 [shape = 'u8[4096]{0}', space=vmem, size = 0x1000, scoped, tag = 'output window, operand 0, single buffered']
    %22 = vsyncpa [#allocation3], 0
    %23 = vsyncpa [#allocation6], 0
    %24 = vsyncpa [#allocation9], 0
    %25 = vsyncpa [#allocation4], 0
    // Predicated region
    $region2: #{tpu_custom_call.1} parent=1 // pred_check
      _
    $region3: #{tpu_custom_call.1} parent=1 // pred_check_branch
      %27 = sbr.rel (0) target = $region5
    $region4: #{tpu_custom_call.1} parent=1 // pred_region
      _
    $region5: #{tpu_custom_call.1} parent=1 // pred_fallthru
      _
    // Predicated region
    $region6: #{tpu_custom_call.1} parent=1 // pred_check
      _
    $region7: #{tpu_custom_call.1} parent=1 // pred_check_branch
      %29 = sbr.rel (0) target = $region9
    $region8: #{tpu_custom_call.1} parent=1 // pred_region
      _
    $region9: #{tpu_custom_call.1} parent=1 // pred_fallthru
      _
    // Predicated region
    $region10: #{tpu_custom_call.1} parent=1 // pred_check
      _
    $region11: #{tpu_custom_call.1} parent=1 // pred_check_branch
      %31 = sbr.rel (0) target = $region13
    $region12: #{tpu_custom_call.1} parent=1 // pred_region
      _
    $region13: #{tpu_custom_call.1} parent=1 // pred_fallthru
      _
    // Predicated region
    $region14: #{tpu_custom_call.1} parent=1 // pred_check
      _
    $region15: #{tpu_custom_call.1} parent=1 // pred_check_branch
      %33 = sbr.rel (0) target = $region17
    $region16: #{tpu_custom_call.1} parent=1 // pred_region
      %s35 = ssub.s32 4096, 4096
      %36 = vsyncadd [#allocation3], %s35
      %s37 = sshll.u32 [#allocation2], 4
      %s38 = int_to_ptr.vmem [resolvable:$true] %s37
      %43 = dma.hbm_to_vmem [thread:$0]  %s3, 4096, %s38, [#allocation3], 128, 128, 8
    $region17: #{tpu_custom_call.1} parent=1 // pred_fallthru
      _
    // Predicated region
    $region18: #{tpu_custom_call.1} parent=1 // pred_check
      _
    $region19: #{tpu_custom_call.1} parent=1 // pred_check_branch
      %45 = sbr.rel (0) target = $region21
    $region20: #{tpu_custom_call.1} parent=1 // pred_region
      _
    $region21: #{tpu_custom_call.1} parent=1 // pred_fallthru
      _
    // Predicated region
    $region22: #{tpu_custom_call.1} parent=1 // pred_check
      _
    $region23: #{tpu_custom_call.1} parent=1 // pred_check_branch
      %47 = sbr.rel (0) target = $region25
    $region24: #{tpu_custom_call.1} parent=1 // pred_region
      %s49 = ssub.s32 4096, 4096
      %50 = vsyncadd [#allocation6], %s49
      %s51 = sshll.u32 [#allocation5], 4
      %s52 = int_to_ptr.vmem [resolvable:$true] %s51
      %57 = dma.hbm_to_vmem [thread:$0]  %s5, 4096, %s52, [#allocation6], 128, 128, 8
    $region25: #{tpu_custom_call.1} parent=1 // pred_fallthru
      _
    // Predicated region
    $region26: #{tpu_custom_call.1} parent=1 // pred_check
      _
    $region27: #{tpu_custom_call.1} parent=1 // pred_check_branch
      %59 = sbr.rel (0) target = $region29
    $region28: #{tpu_custom_call.1} parent=1 // pred_region
      _
    $region29: #{tpu_custom_call.1} parent=1 // pred_fallthru
      _
    // Predicated region
    $region30: #{tpu_custom_call.1} parent=1 // pred_check
      _
    $region31: #{tpu_custom_call.1} parent=1 // pred_check_branch
      %61 = sbr.rel (0) target = $region33
    $region32: #{tpu_custom_call.1} parent=1 // pred_region
      _
    $region33: #{tpu_custom_call.1} parent=1 // pred_fallthru
      _
    // Predicated region
    $region34: #{tpu_custom_call.1} parent=1 // pred_check
      _
    $region35: #{tpu_custom_call.1} parent=1 // pred_check_branch
      %63 = sbr.rel (0) target = $region37
    $region36: #{tpu_custom_call.1} parent=1 // pred_region
      _
    $region37: #{tpu_custom_call.1} parent=1 // pred_fallthru
      _
    // Predicated region
    $region38: #{tpu_custom_call.1} parent=1 // pred_check
      _
    $region39: #{tpu_custom_call.1} parent=1 // pred_check_branch
      %65 = sbr.rel (0) target = $region41
    $region40: #{tpu_custom_call.1} parent=1 // pred_region
      %s67 = ssub.s32 2048, 2048
      %68 = vsyncadd [#allocation6], %s67
      %s69 = sshll.u32 [#allocation7], 4
      %s70 = int_to_ptr.vmem [resolvable:$true] %s69
      %75 = dma.hbm_to_vmem [thread:$0]  %s9, 2048, %s70, [#allocation6], 128, 128, 8
    $region41: #{tpu_custom_call.1} parent=1 // pred_fallthru
      _
    // Predicated region
    $region42: #{tpu_custom_call.1} parent=1 // pred_check
      _
    $region43: #{tpu_custom_call.1} parent=1 // pred_check_branch
      %77 = sbr.rel (0) target = $region45
    $region44: #{tpu_custom_call.1} parent=1 // pred_region
      _
    $region45: #{tpu_custom_call.1} parent=1 // pred_fallthru
      _
    // Predicated region
    $region46: #{tpu_custom_call.1} parent=1 // pred_check
      _
    $region47: #{tpu_custom_call.1} parent=1 // pred_check_branch
      %79 = sbr.rel (0) target = $region49
    $region48: #{tpu_custom_call.1} parent=1 // pred_region
      %s81 = ssub.s32 4096, 4096
      %82 = vsyncadd [#allocation9], %s81
      %s83 = sshll.u32 [#allocation8], 4
      %s84 = int_to_ptr.vmem [resolvable:$true] %s83
      %89 = dma.hbm_to_vmem [thread:$0]  %s11, 4096, %s84, [#allocation9], 128, 128, 8
    $region49: #{tpu_custom_call.1} parent=1 // pred_fallthru
      _
    // Predicated region
    $region50: #{tpu_custom_call.1} parent=1 // pred_check
      _
    $region51: #{tpu_custom_call.1} parent=1 // pred_check_branch
      %91 = sbr.rel (0) target = $region53
    $region52: #{tpu_custom_call.1} parent=1 // pred_region
      _
    $region53: #{tpu_custom_call.1} parent=1 // pred_fallthru
      _
    // Predicated region
    $region54: #{tpu_custom_call.1} parent=1 // pred_check
      _
    $region55: #{tpu_custom_call.1} parent=1 // pred_check_branch
      %93 = sbr.rel (0) target = $region57
    $region56: #{tpu_custom_call.1} parent=1 // pred_region
      %s95 = ssub.s32 4096, 4096
      %96 = vsyncadd [#allocation9], %s95
      %s97 = sshll.u32 [#allocation10], 4
      %s98 = int_to_ptr.vmem [resolvable:$true] %s97
      %103 = dma.hbm_to_vmem [thread:$0]  %s13, 4096, %s98, [#allocation9], 128, 128, 8
    $region57: #{tpu_custom_call.1} parent=1 // pred_fallthru
      _
    // Predicated region
    $region58: #{tpu_custom_call.1} parent=1 // pred_check
      _
    $region59: #{tpu_custom_call.1} parent=1 // pred_check_branch
      %105 = sbr.rel (0) target = $region61
    $region60: #{tpu_custom_call.1} parent=1 // pred_region
      _
    $region61: #{tpu_custom_call.1} parent=1 // pred_fallthru
      _
    // Predicated region
    $region62: #{tpu_custom_call.1} parent=1 // pred_check
      _
    $region63: #{tpu_custom_call.1} parent=1 // pred_check_branch
      %107 = sbr.rel (0) target = $region65
    $region64: #{tpu_custom_call.1} parent=1 // pred_region
      _
    $region65: #{tpu_custom_call.1} parent=1 // pred_fallthru
      _
    // Predicated region
    $region66: #{tpu_custom_call.1} parent=1 // pred_check
      _
    $region67: #{tpu_custom_call.1} parent=1 // pred_check_branch
      %109 = sbr.rel (0) target = $region69
    $region68: #{tpu_custom_call.1} parent=1 // pred_region
      _
    $region69: #{tpu_custom_call.1} parent=1 // pred_fallthru
      _
    // Predicated region
    $region70: #{tpu_custom_call.1} parent=1 // pred_check
      _
    $region71: #{tpu_custom_call.1} parent=1 // pred_check_branch
      %111 = sbr.rel (0) target = $region73
    $region72: #{tpu_custom_call.1} parent=1 // pred_region
      %112 = dma.done [#allocation3], 4096
    $region73: #{tpu_custom_call.1} parent=1 // pred_fallthru
      _
    // Predicated region
    $region74: #{tpu_custom_call.1} parent=1 // pred_check
      _
    $region75: #{tpu_custom_call.1} parent=1 // pred_check_branch
      %114 = sbr.rel (0) target = $region77
    $region76: #{tpu_custom_call.1} parent=1 // pred_region
      %115 = dma.done [#allocation6], 4096
    $region77: #{tpu_custom_call.1} parent=1 // pred_fallthru
      _
    // Predicated region
    $region78: #{tpu_custom_call.1} parent=1 // pred_check
      _
    $region79: #{tpu_custom_call.1} parent=1 // pred_check_branch
      %117 = sbr.rel (0) target = $region81
    $region80: #{tpu_custom_call.1} parent=1 // pred_region
      %118 = dma.done [#allocation6], 2048
    $region81: #{tpu_custom_call.1} parent=1 // pred_fallthru
      _
    // Predicated region
    $region82: #{tpu_custom_call.1} parent=1 // pred_check
      _
    $region83: #{tpu_custom_call.1} parent=1 // pred_check_branch
      %120 = sbr.rel (0) target = $region85
    $region84: #{tpu_custom_call.1} parent=1 // pred_region
      %121 = dma.done [#allocation9], 4096
    $region85: #{tpu_custom_call.1} parent=1 // pred_fallthru
      _
    // Predicated region
    $region86: #{tpu_custom_call.1} parent=1 // pred_check
      _
    $region87: #{tpu_custom_call.1} parent=1 // pred_check_branch
      %123 = sbr.rel (0) target = $region89
    $region88: #{tpu_custom_call.1} parent=1 // pred_region
      %124 = dma.done [#allocation9], 4096
    $region89: #{tpu_custom_call.1} parent=1 // pred_fallthru
      _
    %v126 = vld [vmem:[%s0] sm:$0xff]
    %v127 = vpack.c.bf16 %v126, %v126
    %v128 = vld [vmem:[%s1] sm:$0xff]
    %v129 = vld [vmem:[%s1 + $0x8] sm:$0xff]
    %v130 = vld [vmem:[%s1 + $0x10] sm:$0xff]
    %v131 = vld [vmem:[%s1 + $0x18] sm:$0xff]
    %v132 = vld [vmem:[%s2] sm:$0x3]
    %v134 = vlaneseq
    %v135 = vshrl.u32 %v134, 7
    %v136 = vsub.s32 0, %v135
    %v137 = vrot.slane %v132, %v136
    %v138 = vlaneseq
    %v139 = vshrl.u32 %v138, 7
    %v140 = vsub.s32 1, %v139
    %v141 = vrot.slane %v132, %v140
    %v148 = vunpack.c.l.b16 %v128
    %v149 = vunpack.c.h.b16 %v128
    %v150 = vunpack.c.l.b16 %v129
    %v151 = vunpack.c.h.b16 %v129
    %v152 = vunpack.c.l.b16 %v130
    %v153 = vunpack.c.h.b16 %v130
    %v154 = vunpack.c.l.b16 %v131
    %v155 = vunpack.c.h.b16 %v131
    %v156 = vpack.c.b16 %v150, %v148
    %v157 = vpack.c.b16 %v151, %v149
    %v158 = vpack.c.b16 %v154, %v152
    %v159 = vpack.c.b16 %v155, %v153
    %vm164 = vcmask 261120
    %v166 = vsel %vm164, %v127, 0
    %168 = vmatprep.subr.bf16.mxu0 %v157
    %169 = vmatpush1.bf16.msra.mxu0 %v156
    %170 = vmatprep.subr.bf16.mxu0 %v159
    %171 = vmatpush1.bf16.msra.mxu0 %v158
    %172 = vmatprep.subr.bf16.mxu0 0
    %173 = vmatpush1.bf16.msra.mxu0 0
    %174 = vmatprep.subr.bf16.mxu0 0
    %175 = vmatpush1.bf16.msra.mxu0 0
    %176 = vmatprep.subr.bf16.mxu0 0
    %177 = vmatpush1.bf16.msra.mxu0 0
    %178 = vmatprep.subr.bf16.mxu0 0
    %179 = vmatpush1.bf16.msra.mxu0 0
    %180 = vmatprep.subr.bf16.mxu0 0
    %181 = vmatpush1.bf16.msra.mxu0 0
    %182 = vmatprep.subr.bf16.mxu0 0
    %183 = vmatpush1.bf16.msra.mxu0 0
    %184 = vmatprep.subr.bf16.mxu0 0
    %185 = vmatpush1.bf16.msra.mxu0 0
    %186 = vmatprep.subr.bf16.mxu0 0
    %187 = vmatpush1.bf16.msra.mxu0 0
    %188 = vmatprep.subr.bf16.mxu0 0
    %189 = vmatpush1.bf16.msra.mxu0 0
    %190 = vmatprep.subr.bf16.mxu0 0
    %191 = vmatpush1.bf16.msra.mxu0 0
    %192 = vmatprep.subr.bf16.mxu0 0
    %193 = vmatpush1.bf16.msra.mxu0 0
    %194 = vmatprep.subr.bf16.mxu0 0
    %195 = vmatpush1.bf16.msra.mxu0 0
    %196 = vmatprep.subr.bf16.mxu0 0
    %197 = vmatpush1.bf16.msra.mxu0 0
    %198 = vmatprep.subr.bf16.mxu0 0
    %199 = vmatpush1.bf16.msra.mxu0 0
    %200 = vmatprep.mubr.bf16.mxu0 0
    %201 = vmatmul.mubr.bf16.gmra.mrb[0].mxu0 %v166
    %v202 = vpop.f32.mrb[0].mxu0
    %v203 = vadd.f32 %v137, %v202
    %v204 = vpop.f32.mrb[0].mxu0
    %v205 = vadd.f32 %v141, %v204
    %v206 = vpop.f32.mrb[0].mxu0
    %v207 = vpop.f32.mrb[0].mxu0
    %208 = vdwg.mxu0
    %v209 = vmax.f32 %v203, 0.0
    %v210 = vmax.f32 %v205, 0.0
    %v211 = vpack.c.bf16 %v209, %v209
    %v212 = vpack.c.bf16 %v210, %v210
    %v213 = vld [vmem:[#allocation2] sm:$0xff]
    %v214 = vld [vmem:[#allocation2 + $0x8] sm:$0xff]
    %v215 = vld [vmem:[#allocation2 + $0x10] sm:$0xff]
    %v216 = vld [vmem:[#allocation2 + $0x18] sm:$0xff]
    %v217 = vld [vmem:[#allocation2 + $0x20] sm:$0xff]
    %v218 = vld [vmem:[#allocation2 + $0x28] sm:$0xff]
    %v219 = vld [vmem:[#allocation2 + $0x30] sm:$0xff]
    %v220 = vld [vmem:[#allocation2 + $0x38] sm:$0xff]
    %v221 = vld [vmem:[#allocation2 + $0x40] sm:$0xff]
    %v222 = vld [vmem:[#allocation2 + $0x48] sm:$0xff]
    %v223 = vld [vmem:[#allocation2 + $0x50] sm:$0xff]
    %v224 = vld [vmem:[#allocation2 + $0x58] sm:$0xff]
    %v225 = vld [vmem:[#allocation2 + $0x60] sm:$0xff]
    %v226 = vld [vmem:[#allocation2 + $0x68] sm:$0xff]
    %v227 = vld [vmem:[#allocation2 + $0x70] sm:$0xff]
    %v228 = vld [vmem:[#allocation2 + $0x78] sm:$0xff]
    %v229 = vld [vmem:[#allocation2 + $0x80] sm:$0xff]
    %v230 = vld [vmem:[#allocation2 + $0x88] sm:$0xff]
    %v231 = vld [vmem:[#allocation2 + $0x90] sm:$0xff]
    %v232 = vld [vmem:[#allocation2 + $0x98] sm:$0xff]
    %v233 = vld [vmem:[#allocation2 + $0xa0] sm:$0xff]
    %v234 = vld [vmem:[#allocation2 + $0xa8] sm:$0xff]
    %v235 = vld [vmem:[#allocation2 + $0xb0] sm:$0xff]
    %v236 = vld [vmem:[#allocation2 + $0xb8] sm:$0xff]
    %v237 = vld [vmem:[#allocation2 + $0xc0] sm:$0xff]
    %v238 = vld [vmem:[#allocation2 + $0xc8] sm:$0xff]
    %v239 = vld [vmem:[#allocation2 + $0xd0] sm:$0xff]
    %v240 = vld [vmem:[#allocation2 + $0xd8] sm:$0xff]
    %v241 = vld [vmem:[#allocation2 + $0xe0] sm:$0xff]
    %v242 = vld [vmem:[#allocation2 + $0xe8] sm:$0xff]
    %v243 = vld [vmem:[#allocation2 + $0xf0] sm:$0xff]
    %v244 = vld [vmem:[#allocation2 + $0xf8] sm:$0xff]
    %v245 = vld [vmem:[%s4] sm:$0x3]
    %v247 = vlaneseq
    %v248 = vshrl.u32 %v247, 7
    %v249 = vsub.s32 0, %v248
    %v250 = vrot.slane %v245, %v249
    %v251 = vlaneseq
    %v252 = vshrl.u32 %v251, 7
    %v253 = vsub.s32 1, %v252
    %v254 = vrot.slane %v245, %v253
    %v289 = vunpack.c.l.b16 %v213
    %v290 = vunpack.c.h.b16 %v213
    %v291 = vunpack.c.l.b16 %v214
    %v292 = vunpack.c.h.b16 %v214
    %v293 = vunpack.c.l.b16 %v215
    %v294 = vunpack.c.h.b16 %v215
    %v295 = vunpack.c.l.b16 %v216
    %v296 = vunpack.c.h.b16 %v216
    %v297 = vunpack.c.l.b16 %v217
    %v298 = vunpack.c.h.b16 %v217
    %v299 = vunpack.c.l.b16 %v218
    %v300 = vunpack.c.h.b16 %v218
    %v301 = vunpack.c.l.b16 %v219
    %v302 = vunpack.c.h.b16 %v219
    %v303 = vunpack.c.l.b16 %v220
    %v304 = vunpack.c.h.b16 %v220
    %v305 = vunpack.c.l.b16 %v221
    %v306 = vunpack.c.h.b16 %v221
    %v307 = vunpack.c.l.b16 %v222
    %v308 = vunpack.c.h.b16 %v222
    %v309 = vunpack.c.l.b16 %v223
    %v310 = vunpack.c.h.b16 %v223
    %v311 = vunpack.c.l.b16 %v224
    %v312 = vunpack.c.h.b16 %v224
    %v313 = vunpack.c.l.b16 %v225
    %v314 = vunpack.c.h.b16 %v225
    %v315 = vunpack.c.l.b16 %v226
    %v316 = vunpack.c.h.b16 %v226
    %v317 = vunpack.c.l.b16 %v227
    %v318 = vunpack.c.h.b16 %v227
    %v319 = vunpack.c.l.b16 %v228
    %v320 = vunpack.c.h.b16 %v228
    %v321 = vunpack.c.l.b16 %v229
    %v322 = vunpack.c.h.b16 %v229
    %v323 = vunpack.c.l.b16 %v230
    %v324 = vunpack.c.h.b16 %v230
    %v325 = vunpack.c.l.b16 %v231
    %v326 = vunpack.c.h.b16 %v231
    %v327 = vunpack.c.l.b16 %v232
    %v328 = vunpack.c.h.b16 %v232
    %v329 = vunpack.c.l.b16 %v233
    %v330 = vunpack.c.h.b16 %v233
    %v331 = vunpack.c.l.b16 %v234
    %v332 = vunpack.c.h.b16 %v234
    %v333 = vunpack.c.l.b16 %v235
    %v334 = vunpack.c.h.b16 %v235
    %v335 = vunpack.c.l.b16 %v236
    %v336 = vunpack.c.h.b16 %v236
    %v337 = vunpack.c.l.b16 %v237
    %v338 = vunpack.c.h.b16 %v237
    %v339 = vunpack.c.l.b16 %v238
    %v340 = vunpack.c.h.b16 %v238
    %v341 = vunpack.c.l.b16 %v239
    %v342 = vunpack.c.h.b16 %v239
    %v343 = vunpack.c.l.b16 %v240
    %v344 = vunpack.c.h.b16 %v240
    %v345 = vunpack.c.l.b16 %v241
    %v346 = vunpack.c.h.b16 %v241
    %v347 = vunpack.c.l.b16 %v242
    %v348 = vunpack.c.h.b16 %v242
    %v349 = vunpack.c.l.b16 %v243
    %v350 = vunpack.c.h.b16 %v243
    %v351 = vunpack.c.l.b16 %v244
    %v352 = vunpack.c.h.b16 %v244
    %v353 = vpack.c.b16 %v291, %v289
    %v354 = vpack.c.b16 %v292, %v290
    %v355 = vpack.c.b16 %v295, %v293
    %v356 = vpack.c.b16 %v296, %v294
    %v357 = vpack.c.b16 %v299, %v297
    %v358 = vpack.c.b16 %v300, %v298
    %v359 = vpack.c.b16 %v303, %v301
    %v360 = vpack.c.b16 %v304, %v302
    %v361 = vpack.c.b16 %v307, %v305
    %v362 = vpack.c.b16 %v308, %v306
    %v363 = vpack.c.b16 %v311, %v309
    %v364 = vpack.c.b16 %v312, %v310
    %v365 = vpack.c.b16 %v315, %v313
    %v366 = vpack.c.b16 %v316, %v314
    %v367 = vpack.c.b16 %v319, %v317
    %v368 = vpack.c.b16 %v320, %v318
    %v369 = vpack.c.b16 %v323, %v321
    %v370 = vpack.c.b16 %v324, %v322
    %v371 = vpack.c.b16 %v327, %v325
    %v372 = vpack.c.b16 %v328, %v326
    %v373 = vpack.c.b16 %v331, %v329
    %v374 = vpack.c.b16 %v332, %v330
    %v375 = vpack.c.b16 %v335, %v333
    %v376 = vpack.c.b16 %v336, %v334
    %v377 = vpack.c.b16 %v339, %v337
    %v378 = vpack.c.b16 %v340, %v338
    %v379 = vpack.c.b16 %v343, %v341
    %v380 = vpack.c.b16 %v344, %v342
    %v381 = vpack.c.b16 %v347, %v345
    %v382 = vpack.c.b16 %v348, %v346
    %v383 = vpack.c.b16 %v351, %v349
    %v384 = vpack.c.b16 %v352, %v350
    %417 = vmatprep.subr.bf16.mxu0 %v354
    %418 = vmatpush1.bf16.msra.mxu0 %v353
    %419 = vmatprep.subr.bf16.mxu0 %v356
    %420 = vmatpush1.bf16.msra.mxu0 %v355
    %421 = vmatprep.subr.bf16.mxu0 %v358
    %422 = vmatpush1.bf16.msra.mxu0 %v357
    %423 = vmatprep.subr.bf16.mxu0 %v360
    %424 = vmatpush1.bf16.msra.mxu0 %v359
    %425 = vmatprep.subr.bf16.mxu0 %v362
    %426 = vmatpush1.bf16.msra.mxu0 %v361
    %427 = vmatprep.subr.bf16.mxu0 %v364
    %428 = vmatpush1.bf16.msra.mxu0 %v363
    %429 = vmatprep.subr.bf16.mxu0 %v366
    %430 = vmatpush1.bf16.msra.mxu0 %v365
    %431 = vmatprep.subr.bf16.mxu0 %v368
    %432 = vmatpush1.bf16.msra.mxu0 %v367
    %433 = vmatprep.subr.bf16.mxu0 %v370
    %434 = vmatpush1.bf16.msra.mxu0 %v369
    %435 = vmatprep.subr.bf16.mxu0 %v372
    %436 = vmatpush1.bf16.msra.mxu0 %v371
    %437 = vmatprep.subr.bf16.mxu0 %v374
    %438 = vmatpush1.bf16.msra.mxu0 %v373
    %439 = vmatprep.subr.bf16.mxu0 %v376
    %440 = vmatpush1.bf16.msra.mxu0 %v375
    %441 = vmatprep.subr.bf16.mxu0 %v378
    %442 = vmatpush1.bf16.msra.mxu0 %v377
    %443 = vmatprep.subr.bf16.mxu0 %v380
    %444 = vmatpush1.bf16.msra.mxu0 %v379
    %445 = vmatprep.subr.bf16.mxu0 %v382
    %446 = vmatpush1.bf16.msra.mxu0 %v381
    %447 = vmatprep.subr.bf16.mxu0 %v384
    %448 = vmatpush1.bf16.msra.mxu0 %v383
    %449 = vmatprep.mubr.bf16.mxu0 %v212
    %450 = vmatmul.mubr.bf16.gmra.mrb[0].mxu0 %v211
    %v451 = vpop.f32.mrb[0].mxu0
    %v452 = vadd.f32 %v250, %v451
    %v453 = vpop.f32.mrb[0].mxu0
    %v454 = vadd.f32 %v254, %v453
    %v455 = vpop.f32.mrb[0].mxu0
    %v456 = vpop.f32.mrb[0].mxu0
    %457 = vdwg.mxu0
    %v458 = vmax.f32 %v452, 0.0
    %v459 = vmax.f32 %v454, 0.0
    %v460 = vpack.c.bf16 %v458, %v458
    %v461 = vpack.c.bf16 %v459, %v459
    %v462 = vld [vmem:[#allocation5] sm:$0xff]
    %v463 = vld [vmem:[#allocation5 + $0x8] sm:$0xff]
    %v464 = vld [vmem:[#allocation5 + $0x10] sm:$0xff]
    %v465 = vld [vmem:[#allocation5 + $0x18] sm:$0xff]
    %v466 = vld [vmem:[#allocation5 + $0x20] sm:$0xff]
    %v467 = vld [vmem:[#allocation5 + $0x28] sm:$0xff]
    %v468 = vld [vmem:[#allocation5 + $0x30] sm:$0xff]
    %v469 = vld [vmem:[#allocation5 + $0x38] sm:$0xff]
    %v470 = vld [vmem:[#allocation5 + $0x40] sm:$0xff]
    %v471 = vld [vmem:[#allocation5 + $0x48] sm:$0xff]
    %v472 = vld [vmem:[#allocation5 + $0x50] sm:$0xff]
    %v473 = vld [vmem:[#allocation5 + $0x58] sm:$0xff]
    %v474 = vld [vmem:[#allocation5 + $0x60] sm:$0xff]
    %v475 = vld [vmem:[#allocation5 + $0x68] sm:$0xff]
    %v476 = vld [vmem:[#allocation5 + $0x70] sm:$0xff]
    %v477 = vld [vmem:[#allocation5 + $0x78] sm:$0xff]
    %v478 = vld [vmem:[#allocation5 + $0x80] sm:$0xff]
    %v479 = vld [vmem:[#allocation5 + $0x88] sm:$0xff]
    %v480 = vld [vmem:[#allocation5 + $0x90] sm:$0xff]
    %v481 = vld [vmem:[#allocation5 + $0x98] sm:$0xff]
    %v482 = vld [vmem:[#allocation5 + $0xa0] sm:$0xff]
    %v483 = vld [vmem:[#allocation5 + $0xa8] sm:$0xff]
    %v484 = vld [vmem:[#allocation5 + $0xb0] sm:$0xff]
    %v485 = vld [vmem:[#allocation5 + $0xb8] sm:$0xff]
    %v486 = vld [vmem:[#allocation5 + $0xc0] sm:$0xff]
    %v487 = vld [vmem:[#allocation5 + $0xc8] sm:$0xff]
    %v488 = vld [vmem:[#allocation5 + $0xd0] sm:$0xff]
    %v489 = vld [vmem:[#allocation5 + $0xd8] sm:$0xff]
    %v490 = vld [vmem:[#allocation5 + $0xe0] sm:$0xff]
    %v491 = vld [vmem:[#allocation5 + $0xe8] sm:$0xff]
    %v492 = vld [vmem:[#allocation5 + $0xf0] sm:$0xff]
    %v493 = vld [vmem:[#allocation5 + $0xf8] sm:$0xff]
    %v494 = vld [vmem:[%s6] sm:$0x3]
    %v496 = vlaneseq
    %v497 = vshrl.u32 %v496, 7
    %v498 = vsub.s32 0, %v497
    %v499 = vrot.slane %v494, %v498
    %v500 = vlaneseq
    %v501 = vshrl.u32 %v500, 7
    %v502 = vsub.s32 1, %v501
    %v503 = vrot.slane %v494, %v502
    %v538 = vunpack.c.l.b16 %v462
    %v539 = vunpack.c.h.b16 %v462
    %v540 = vunpack.c.l.b16 %v463
    %v541 = vunpack.c.h.b16 %v463
    %v542 = vunpack.c.l.b16 %v464
    %v543 = vunpack.c.h.b16 %v464
    %v544 = vunpack.c.l.b16 %v465
    %v545 = vunpack.c.h.b16 %v465
    %v546 = vunpack.c.l.b16 %v466
    %v547 = vunpack.c.h.b16 %v466
    %v548 = vunpack.c.l.b16 %v467
    %v549 = vunpack.c.h.b16 %v467
    %v550 = vunpack.c.l.b16 %v468
    %v551 = vunpack.c.h.b16 %v468
    %v552 = vunpack.c.l.b16 %v469
    %v553 = vunpack.c.h.b16 %v469
    %v554 = vunpack.c.l.b16 %v470
    %v555 = vunpack.c.h.b16 %v470
    %v556 = vunpack.c.l.b16 %v471
    %v557 = vunpack.c.h.b16 %v471
    %v558 = vunpack.c.l.b16 %v472
    %v559 = vunpack.c.h.b16 %v472
    %v560 = vunpack.c.l.b16 %v473
    %v561 = vunpack.c.h.b16 %v473
    %v562 = vunpack.c.l.b16 %v474
    %v563 = vunpack.c.h.b16 %v474
    %v564 = vunpack.c.l.b16 %v475
    %v565 = vunpack.c.h.b16 %v475
    %v566 = vunpack.c.l.b16 %v476
    %v567 = vunpack.c.h.b16 %v476
    %v568 = vunpack.c.l.b16 %v477
    %v569 = vunpack.c.h.b16 %v477
    %v570 = vunpack.c.l.b16 %v478
    %v571 = vunpack.c.h.b16 %v478
    %v572 = vunpack.c.l.b16 %v479
    %v573 = vunpack.c.h.b16 %v479
    %v574 = vunpack.c.l.b16 %v480
    %v575 = vunpack.c.h.b16 %v480
    %v576 = vunpack.c.l.b16 %v481
    %v577 = vunpack.c.h.b16 %v481
    %v578 = vunpack.c.l.b16 %v482
    %v579 = vunpack.c.h.b16 %v482
    %v580 = vunpack.c.l.b16 %v483
    %v581 = vunpack.c.h.b16 %v483
    %v582 = vunpack.c.l.b16 %v484
    %v583 = vunpack.c.h.b16 %v484
    %v584 = vunpack.c.l.b16 %v485
    %v585 = vunpack.c.h.b16 %v485
    %v586 = vunpack.c.l.b16 %v486
    %v587 = vunpack.c.h.b16 %v486
    %v588 = vunpack.c.l.b16 %v487
    %v589 = vunpack.c.h.b16 %v487
    %v590 = vunpack.c.l.b16 %v488
    %v591 = vunpack.c.h.b16 %v488
    %v592 = vunpack.c.l.b16 %v489
    %v593 = vunpack.c.h.b16 %v489
    %v594 = vunpack.c.l.b16 %v490
    %v595 = vunpack.c.h.b16 %v490
    %v596 = vunpack.c.l.b16 %v491
    %v597 = vunpack.c.h.b16 %v491
    %v598 = vunpack.c.l.b16 %v492
    %v599 = vunpack.c.h.b16 %v492
    %v600 = vunpack.c.l.b16 %v493
    %v601 = vunpack.c.h.b16 %v493
    %v602 = vpack.c.b16 %v540, %v538
    %v603 = vpack.c.b16 %v541, %v539
    %v604 = vpack.c.b16 %v544, %v542
    %v605 = vpack.c.b16 %v545, %v543
    %v606 = vpack.c.b16 %v548, %v546
    %v607 = vpack.c.b16 %v549, %v547
    %v608 = vpack.c.b16 %v552, %v550
    %v609 = vpack.c.b16 %v553, %v551
    %v610 = vpack.c.b16 %v556, %v554
    %v611 = vpack.c.b16 %v557, %v555
    %v612 = vpack.c.b16 %v560, %v558
    %v613 = vpack.c.b16 %v561, %v559
    %v614 = vpack.c.b16 %v564, %v562
    %v615 = vpack.c.b16 %v565, %v563
    %v616 = vpack.c.b16 %v568, %v566
    %v617 = vpack.c.b16 %v569, %v567
    %v618 = vpack.c.b16 %v572, %v570
    %v619 = vpack.c.b16 %v573, %v571
    %v620 = vpack.c.b16 %v576, %v574
    %v621 = vpack.c.b16 %v577, %v575
    %v622 = vpack.c.b16 %v580, %v578
    %v623 = vpack.c.b16 %v581, %v579
    %v624 = vpack.c.b16 %v584, %v582
    %v625 = vpack.c.b16 %v585, %v583
    %v626 = vpack.c.b16 %v588, %v586
    %v627 = vpack.c.b16 %v589, %v587
    %v628 = vpack.c.b16 %v592, %v590
    %v629 = vpack.c.b16 %v593, %v591
    %v630 = vpack.c.b16 %v596, %v594
    %v631 = vpack.c.b16 %v597, %v595
    %v632 = vpack.c.b16 %v600, %v598
    %v633 = vpack.c.b16 %v601, %v599
    %666 = vmatprep.subr.bf16.mxu0 %v603
    %667 = vmatpush1.bf16.msra.mxu0 %v602
    %668 = vmatprep.subr.bf16.mxu0 %v605
    %669 = vmatpush1.bf16.msra.mxu0 %v604
    %670 = vmatprep.subr.bf16.mxu0 %v607
    %671 = vmatpush1.bf16.msra.mxu0 %v606
    %672 = vmatprep.subr.bf16.mxu0 %v609
    %673 = vmatpush1.bf16.msra.mxu0 %v608
    %674 = vmatprep.subr.bf16.mxu0 %v611
    %675 = vmatpush1.bf16.msra.mxu0 %v610
    %676 = vmatprep.subr.bf16.mxu0 %v613
    %677 = vmatpush1.bf16.msra.mxu0 %v612
    %678 = vmatprep.subr.bf16.mxu0 %v615
    %679 = vmatpush1.bf16.msra.mxu0 %v614
    %680 = vmatprep.subr.bf16.mxu0 %v617
    %681 = vmatpush1.bf16.msra.mxu0 %v616
    %682 = vmatprep.subr.bf16.mxu0 %v619
    %683 = vmatpush1.bf16.msra.mxu0 %v618
    %684 = vmatprep.subr.bf16.mxu0 %v621
    %685 = vmatpush1.bf16.msra.mxu0 %v620
    %686 = vmatprep.subr.bf16.mxu0 %v623
    %687 = vmatpush1.bf16.msra.mxu0 %v622
    %688 = vmatprep.subr.bf16.mxu0 %v625
    %689 = vmatpush1.bf16.msra.mxu0 %v624
    %690 = vmatprep.subr.bf16.mxu0 %v627
    %691 = vmatpush1.bf16.msra.mxu0 %v626
    %692 = vmatprep.subr.bf16.mxu0 %v629
    %693 = vmatpush1.bf16.msra.mxu0 %v628
    %694 = vmatprep.subr.bf16.mxu0 %v631
    %695 = vmatpush1.bf16.msra.mxu0 %v630
    %696 = vmatprep.subr.bf16.mxu0 %v633
    %697 = vmatpush1.bf16.msra.mxu0 %v632
    %698 = vmatprep.mubr.bf16.mxu0 %v461
    %699 = vmatmul.mubr.bf16.gmra.mrb[0].mxu0 %v460
    %v700 = vpop.f32.mrb[0].mxu0
    %v701 = vadd.f32 %v499, %v700
    %v702 = vpop.f32.mrb[0].mxu0
    %v703 = vadd.f32 %v503, %v702
    %v704 = vpop.f32.mrb[0].mxu0
    %v705 = vpop.f32.mrb[0].mxu0
    %706 = vdwg.mxu0
    %v707 = vmax.f32 %v701, 0.0
    %v708 = vmax.f32 %v703, 0.0
    %v709 = vpack.c.bf16 %v707, %v707
    %v710 = vpack.c.bf16 %v708, %v708
    %v711 = vld [vmem:[%s7] sm:$0xf]
    %v712 = vld [vmem:[%s7 + $0x4] sm:$0xf]
    %v713 = vld [vmem:[%s7 + $0x8] sm:$0xf]
    %v714 = vld [vmem:[%s7 + $0xc] sm:$0xf]
    %v715 = vld [vmem:[%s7 + $0x10] sm:$0xf]
    %v716 = vld [vmem:[%s7 + $0x14] sm:$0xf]
    %v717 = vld [vmem:[%s7 + $0x18] sm:$0xf]
    %v718 = vld [vmem:[%s7 + $0x1c] sm:$0xf]
    %v719 = vld [vmem:[%s7 + $0x20] sm:$0xf]
    %v720 = vld [vmem:[%s7 + $0x24] sm:$0xf]
    %v721 = vld [vmem:[%s7 + $0x28] sm:$0xf]
    %v722 = vld [vmem:[%s7 + $0x2c] sm:$0xf]
    %v723 = vld [vmem:[%s7 + $0x30] sm:$0xf]
    %v724 = vld [vmem:[%s7 + $0x34] sm:$0xf]
    %v725 = vld [vmem:[%s7 + $0x38] sm:$0xf]
    %v726 = vld [vmem:[%s7 + $0x3c] sm:$0xf]
    %v727 = vld [vmem:[%s7 + $0x40] sm:$0xf]
    %v728 = vld [vmem:[%s7 + $0x44] sm:$0xf]
    %v729 = vld [vmem:[%s7 + $0x48] sm:$0xf]
    %v730 = vld [vmem:[%s7 + $0x4c] sm:$0xf]
    %v731 = vld [vmem:[%s7 + $0x50] sm:$0xf]
    %v732 = vld [vmem:[%s7 + $0x54] sm:$0xf]
    %v733 = vld [vmem:[%s7 + $0x58] sm:$0xf]
    %v734 = vld [vmem:[%s7 + $0x5c] sm:$0xf]
    %v735 = vld [vmem:[%s7 + $0x60] sm:$0xf]
    %v736 = vld [vmem:[%s7 + $0x64] sm:$0xf]
    %v737 = vld [vmem:[%s7 + $0x68] sm:$0xf]
    %v738 = vld [vmem:[%s7 + $0x6c] sm:$0xf]
    %v739 = vld [vmem:[%s7 + $0x70] sm:$0xf]
    %v740 = vld [vmem:[%s7 + $0x74] sm:$0xf]
    %v741 = vld [vmem:[%s7 + $0x78] sm:$0xf]
    %v742 = vld [vmem:[%s7 + $0x7c] sm:$0xf]
    %v743 = vld [vmem:[%s8] sm:$0x1]
    %v745 = vlaneseq
    %v746 = vshrl.u32 %v745, 7
    %v747 = vsub.s32 0, %v746
    %v748 = vrot.slane %v743, %v747
    %v782 = vunpack.c.l.b16 %v711
    %v783 = vunpack.c.l.b16 %v712
    %v784 = vunpack.c.l.b16 %v713
    %v785 = vunpack.c.l.b16 %v714
    %v786 = vunpack.c.l.b16 %v715
    %v787 = vunpack.c.l.b16 %v716
    %v788 = vunpack.c.l.b16 %v717
    %v789 = vunpack.c.l.b16 %v718
    %v790 = vunpack.c.l.b16 %v719
    %v791 = vunpack.c.l.b16 %v720
    %v792 = vunpack.c.l.b16 %v721
    %v793 = vunpack.c.l.b16 %v722
    %v794 = vunpack.c.l.b16 %v723
    %v795 = vunpack.c.l.b16 %v724
    %v796 = vunpack.c.l.b16 %v725
    %v797 = vunpack.c.l.b16 %v726
    %v798 = vunpack.c.l.b16 %v727
    %v799 = vunpack.c.l.b16 %v728
    %v800 = vunpack.c.l.b16 %v729
    %v801 = vunpack.c.l.b16 %v730
    %v802 = vunpack.c.l.b16 %v731
    %v803 = vunpack.c.l.b16 %v732
    %v804 = vunpack.c.l.b16 %v733
    %v805 = vunpack.c.l.b16 %v734
    %v806 = vunpack.c.l.b16 %v735
    %v807 = vunpack.c.l.b16 %v736
    %v808 = vunpack.c.l.b16 %v737
    %v809 = vunpack.c.l.b16 %v738
    %v810 = vunpack.c.l.b16 %v739
    %v811 = vunpack.c.l.b16 %v740
    %v812 = vunpack.c.l.b16 %v741
    %v813 = vunpack.c.l.b16 %v742
    %v814 = vpack.c.b16 %v783, %v782
    %v815 = vpack.c.b16 %v785, %v784
    %v816 = vpack.c.b16 %v787, %v786
    %v817 = vpack.c.b16 %v789, %v788
    %v818 = vpack.c.b16 %v791, %v790
    %v819 = vpack.c.b16 %v793, %v792
    %v820 = vpack.c.b16 %v795, %v794
    %v821 = vpack.c.b16 %v797, %v796
    %v822 = vpack.c.b16 %v799, %v798
    %v823 = vpack.c.b16 %v801, %v800
    %v824 = vpack.c.b16 %v803, %v802
    %v825 = vpack.c.b16 %v805, %v804
    %v826 = vpack.c.b16 %v807, %v806
    %v827 = vpack.c.b16 %v809, %v808
    %v828 = vpack.c.b16 %v811, %v810
    %v829 = vpack.c.b16 %v813, %v812
    %846 = vmatprep.subr.bf16.mxu0 0
    %847 = vmatpush1.bf16.msra.mxu0 %v814
    %848 = vmatprep.subr.bf16.mxu0 0
    %849 = vmatpush1.bf16.msra.mxu0 %v815
    %850 = vmatprep.subr.bf16.mxu0 0
    %851 = vmatpush1.bf16.msra.mxu0 %v816
    %852 = vmatprep.subr.bf16.mxu0 0
    %853 = vmatpush1.bf16.msra.mxu0 %v817
    %854 = vmatprep.subr.bf16.mxu0 0
    %855 = vmatpush1.bf16.msra.mxu0 %v818
    %856 = vmatprep.subr.bf16.mxu0 0
    %857 = vmatpush1.bf16.msra.mxu0 %v819
    %858 = vmatprep.subr.bf16.mxu0 0
    %859 = vmatpush1.bf16.msra.mxu0 %v820
    %860 = vmatprep.subr.bf16.mxu0 0
    %861 = vmatpush1.bf16.msra.mxu0 %v821
    %862 = vmatprep.subr.bf16.mxu0 0
    %863 = vmatpush1.bf16.msra.mxu0 %v822
    %864 = vmatprep.subr.bf16.mxu0 0
    %865 = vmatpush1.bf16.msra.mxu0 %v823
    %866 = vmatprep.subr.bf16.mxu0 0
    %867 = vmatpush1.bf16.msra.mxu0 %v824
    %868 = vmatprep.subr.bf16.mxu0 0
    %869 = vmatpush1.bf16.msra.mxu0 %v825
    %870 = vmatprep.subr.bf16.mxu0 0
    %871 = vmatpush1.bf16.msra.mxu0 %v826
    %872 = vmatprep.subr.bf16.mxu0 0
    %873 = vmatpush1.bf16.msra.mxu0 %v827
    %874 = vmatprep.subr.bf16.mxu0 0
    %875 = vmatpush1.bf16.msra.mxu0 %v828
    %876 = vmatprep.subr.bf16.mxu0 0
    %877 = vmatpush1.bf16.msra.mxu0 %v829
    %878 = vmatprep.mubr.bf16.mxu0 %v710
    %879 = vmatmul.mubr.bf16.gmra.mrb[0].mxu0 %v709
    %v880 = vpop.f32.mrb[0].mxu0
    %v881 = vadd.f32 %v748, %v880
    %v882 = vpop.f32.mrb[0].mxu0
    %v883 = vpop.f32.mrb[0].mxu0
    %v884 = vpop.f32.mrb[0].mxu0
    %885 = vdwg.mxu0
    %v886 = vmax.f32 %v881, 0.0
    %v887 = vpack.c.bf16 %v886, %v886
    %v888 = vld [vmem:[#allocation7] sm:$0xff]
    %v889 = vld [vmem:[#allocation7 + $0x8] sm:$0xff]
    %v890 = vld [vmem:[#allocation7 + $0x10] sm:$0xff]
    %v891 = vld [vmem:[#allocation7 + $0x18] sm:$0xff]
    %v892 = vld [vmem:[#allocation7 + $0x20] sm:$0xff]
    %v893 = vld [vmem:[#allocation7 + $0x28] sm:$0xff]
    %v894 = vld [vmem:[#allocation7 + $0x30] sm:$0xff]
    %v895 = vld [vmem:[#allocation7 + $0x38] sm:$0xff]
    %v896 = vld [vmem:[#allocation7 + $0x40] sm:$0xff]
    %v897 = vld [vmem:[#allocation7 + $0x48] sm:$0xff]
    %v898 = vld [vmem:[#allocation7 + $0x50] sm:$0xff]
    %v899 = vld [vmem:[#allocation7 + $0x58] sm:$0xff]
    %v900 = vld [vmem:[#allocation7 + $0x60] sm:$0xff]
    %v901 = vld [vmem:[#allocation7 + $0x68] sm:$0xff]
    %v902 = vld [vmem:[#allocation7 + $0x70] sm:$0xff]
    %v903 = vld [vmem:[#allocation7 + $0x78] sm:$0xff]
    %v904 = vld [vmem:[%s10] sm:$0x3]
    %v906 = vlaneseq
    %v907 = vshrl.u32 %v906, 7
    %v908 = vsub.s32 0, %v907
    %v909 = vrot.slane %v904, %v908
    %v910 = vlaneseq
    %v911 = vshrl.u32 %v910, 7
    %v912 = vsub.s32 1, %v911
    %v913 = vrot.slane %v904, %v912
    %v932 = vunpack.c.l.b16 %v888
    %v933 = vunpack.c.h.b16 %v888
    %v934 = vunpack.c.l.b16 %v889
    %v935 = vunpack.c.h.b16 %v889
    %v936 = vunpack.c.l.b16 %v890
    %v937 = vunpack.c.h.b16 %v890
    %v938 = vunpack.c.l.b16 %v891
    %v939 = vunpack.c.h.b16 %v891
    %v940 = vunpack.c.l.b16 %v892
    %v941 = vunpack.c.h.b16 %v892
    %v942 = vunpack.c.l.b16 %v893
    %v943 = vunpack.c.h.b16 %v893
    %v944 = vunpack.c.l.b16 %v894
    %v945 = vunpack.c.h.b16 %v894
    %v946 = vunpack.c.l.b16 %v895
    %v947 = vunpack.c.h.b16 %v895
    %v948 = vunpack.c.l.b16 %v896
    %v949 = vunpack.c.h.b16 %v896
    %v950 = vunpack.c.l.b16 %v897
    %v951 = vunpack.c.h.b16 %v897
    %v952 = vunpack.c.l.b16 %v898
    %v953 = vunpack.c.h.b16 %v898
    %v954 = vunpack.c.l.b16 %v899
    %v955 = vunpack.c.h.b16 %v899
    %v956 = vunpack.c.l.b16 %v900
    %v957 = vunpack.c.h.b16 %v900
    %v958 = vunpack.c.l.b16 %v901
    %v959 = vunpack.c.h.b16 %v901
    %v960 = vunpack.c.l.b16 %v902
    %v961 = vunpack.c.h.b16 %v902
    %v962 = vunpack.c.l.b16 %v903
    %v963 = vunpack.c.h.b16 %v903
    %v964 = vpack.c.b16 %v934, %v932
    %v965 = vpack.c.b16 %v935, %v933
    %v966 = vpack.c.b16 %v938, %v936
    %v967 = vpack.c.b16 %v939, %v937
    %v968 = vpack.c.b16 %v942, %v940
    %v969 = vpack.c.b16 %v943, %v941
    %v970 = vpack.c.b16 %v946, %v944
    %v971 = vpack.c.b16 %v947, %v945
    %v972 = vpack.c.b16 %v950, %v948
    %v973 = vpack.c.b16 %v951, %v949
    %v974 = vpack.c.b16 %v954, %v952
    %v975 = vpack.c.b16 %v955, %v953
    %v976 = vpack.c.b16 %v958, %v956
    %v977 = vpack.c.b16 %v959, %v957
    %v978 = vpack.c.b16 %v962, %v960
    %v979 = vpack.c.b16 %v963, %v961
    %996 = vmatprep.subr.bf16.mxu0 %v965
    %997 = vmatpush1.bf16.msra.mxu0 %v964
    %998 = vmatprep.subr.bf16.mxu0 %v967
    %999 = vmatpush1.bf16.msra.mxu0 %v966
    %1000 = vmatprep.subr.bf16.mxu0 %v969
    %1001 = vmatpush1.bf16.msra.mxu0 %v968
    %1002 = vmatprep.subr.bf16.mxu0 %v971
    %1003 = vmatpush1.bf16.msra.mxu0 %v970
    %1004 = vmatprep.subr.bf16.mxu0 %v973
    %1005 = vmatpush1.bf16.msra.mxu0 %v972
    %1006 = vmatprep.subr.bf16.mxu0 %v975
    %1007 = vmatpush1.bf16.msra.mxu0 %v974
    %1008 = vmatprep.subr.bf16.mxu0 %v977
    %1009 = vmatpush1.bf16.msra.mxu0 %v976
    %1010 = vmatprep.subr.bf16.mxu0 %v979
    %1011 = vmatpush1.bf16.msra.mxu0 %v978
    %1012 = vmatprep.subr.bf16.mxu0 0
    %1013 = vmatpush1.bf16.msra.mxu0 0
    %1014 = vmatprep.subr.bf16.mxu0 0
    %1015 = vmatpush1.bf16.msra.mxu0 0
    %1016 = vmatprep.subr.bf16.mxu0 0
    %1017 = vmatpush1.bf16.msra.mxu0 0
    %1018 = vmatprep.subr.bf16.mxu0 0
    %1019 = vmatpush1.bf16.msra.mxu0 0
    %1020 = vmatprep.subr.bf16.mxu0 0
    %1021 = vmatpush1.bf16.msra.mxu0 0
    %1022 = vmatprep.subr.bf16.mxu0 0
    %1023 = vmatpush1.bf16.msra.mxu0 0
    %1024 = vmatprep.subr.bf16.mxu0 0
    %1025 = vmatpush1.bf16.msra.mxu0 0
    %1026 = vmatprep.subr.bf16.mxu0 0
    %1027 = vmatpush1.bf16.msra.mxu0 0
    %1028 = vmatprep.mubr.bf16.mxu0 0
    %1029 = vmatmul.mubr.bf16.gmra.mrb[0].mxu0 %v887
    %v1030 = vpop.f32.mrb[0].mxu0
    %v1031 = vadd.f32 %v909, %v1030
    %v1032 = vpop.f32.mrb[0].mxu0
    %v1033 = vadd.f32 %v913, %v1032
    %v1034 = vpop.f32.mrb[0].mxu0
    %v1035 = vpop.f32.mrb[0].mxu0
    %1036 = vdwg.mxu0
    %v1037 = vmax.f32 %v1031, 0.0
    %v1038 = vmax.f32 %v1033, 0.0
    %v1039 = vpack.c.bf16 %v1037, %v1037
    %v1040 = vpack.c.bf16 %v1038, %v1038
    %v1041 = vld [vmem:[#allocation8] sm:$0xff]
    %v1042 = vld [vmem:[#allocation8 + $0x8] sm:$0xff]
    %v1043 = vld [vmem:[#allocation8 + $0x10] sm:$0xff]
    %v1044 = vld [vmem:[#allocation8 + $0x18] sm:$0xff]
    %v1045 = vld [vmem:[#allocation8 + $0x20] sm:$0xff]
    %v1046 = vld [vmem:[#allocation8 + $0x28] sm:$0xff]
    %v1047 = vld [vmem:[#allocation8 + $0x30] sm:$0xff]
    %v1048 = vld [vmem:[#allocation8 + $0x38] sm:$0xff]
    %v1049 = vld [vmem:[#allocation8 + $0x40] sm:$0xff]
    %v1050 = vld [vmem:[#allocation8 + $0x48] sm:$0xff]
    %v1051 = vld [vmem:[#allocation8 + $0x50] sm:$0xff]
    %v1052 = vld [vmem:[#allocation8 + $0x58] sm:$0xff]
    %v1053 = vld [vmem:[#allocation8 + $0x60] sm:$0xff]
    %v1054 = vld [vmem:[#allocation8 + $0x68] sm:$0xff]
    %v1055 = vld [vmem:[#allocation8 + $0x70] sm:$0xff]
    %v1056 = vld [vmem:[#allocation8 + $0x78] sm:$0xff]
    %v1057 = vld [vmem:[#allocation8 + $0x80] sm:$0xff]
    %v1058 = vld [vmem:[#allocation8 + $0x88] sm:$0xff]
    %v1059 = vld [vmem:[#allocation8 + $0x90] sm:$0xff]
    %v1060 = vld [vmem:[#allocation8 + $0x98] sm:$0xff]
    %v1061 = vld [vmem:[#allocation8 + $0xa0] sm:$0xff]
    %v1062 = vld [vmem:[#allocation8 + $0xa8] sm:$0xff]
    %v1063 = vld [vmem:[#allocation8 + $0xb0] sm:$0xff]
    %v1064 = vld [vmem:[#allocation8 + $0xb8] sm:$0xff]
    %v1065 = vld [vmem:[#allocation8 + $0xc0] sm:$0xff]
    %v1066 = vld [vmem:[#allocation8 + $0xc8] sm:$0xff]
    %v1067 = vld [vmem:[#allocation8 + $0xd0] sm:$0xff]
    %v1068 = vld [vmem:[#allocation8 + $0xd8] sm:$0xff]
    %v1069 = vld [vmem:[#allocation8 + $0xe0] sm:$0xff]
    %v1070 = vld [vmem:[#allocation8 + $0xe8] sm:$0xff]
    %v1071 = vld [vmem:[#allocation8 + $0xf0] sm:$0xff]
    %v1072 = vld [vmem:[#allocation8 + $0xf8] sm:$0xff]
    %v1073 = vld [vmem:[%s12] sm:$0x3]
    %v1075 = vlaneseq
    %v1076 = vshrl.u32 %v1075, 7
    %v1077 = vsub.s32 0, %v1076
    %v1078 = vrot.slane %v1073, %v1077
    %v1079 = vlaneseq
    %v1080 = vshrl.u32 %v1079, 7
    %v1081 = vsub.s32 1, %v1080
    %v1082 = vrot.slane %v1073, %v1081
    %v1117 = vunpack.c.l.b16 %v1041
    %v1118 = vunpack.c.h.b16 %v1041
    %v1119 = vunpack.c.l.b16 %v1042
    %v1120 = vunpack.c.h.b16 %v1042
    %v1121 = vunpack.c.l.b16 %v1043
    %v1122 = vunpack.c.h.b16 %v1043
    %v1123 = vunpack.c.l.b16 %v1044
    %v1124 = vunpack.c.h.b16 %v1044
    %v1125 = vunpack.c.l.b16 %v1045
    %v1126 = vunpack.c.h.b16 %v1045
    %v1127 = vunpack.c.l.b16 %v1046
    %v1128 = vunpack.c.h.b16 %v1046
    %v1129 = vunpack.c.l.b16 %v1047
    %v1130 = vunpack.c.h.b16 %v1047
    %v1131 = vunpack.c.l.b16 %v1048
    %v1132 = vunpack.c.h.b16 %v1048
    %v1133 = vunpack.c.l.b16 %v1049
    %v1134 = vunpack.c.h.b16 %v1049
    %v1135 = vunpack.c.l.b16 %v1050
    %v1136 = vunpack.c.h.b16 %v1050
    %v1137 = vunpack.c.l.b16 %v1051
    %v1138 = vunpack.c.h.b16 %v1051
    %v1139 = vunpack.c.l.b16 %v1052
    %v1140 = vunpack.c.h.b16 %v1052
    %v1141 = vunpack.c.l.b16 %v1053
    %v1142 = vunpack.c.h.b16 %v1053
    %v1143 = vunpack.c.l.b16 %v1054
    %v1144 = vunpack.c.h.b16 %v1054
    %v1145 = vunpack.c.l.b16 %v1055
    %v1146 = vunpack.c.h.b16 %v1055
    %v1147 = vunpack.c.l.b16 %v1056
    %v1148 = vunpack.c.h.b16 %v1056
    %v1149 = vunpack.c.l.b16 %v1057
    %v1150 = vunpack.c.h.b16 %v1057
    %v1151 = vunpack.c.l.b16 %v1058
    %v1152 = vunpack.c.h.b16 %v1058
    %v1153 = vunpack.c.l.b16 %v1059
    %v1154 = vunpack.c.h.b16 %v1059
    %v1155 = vunpack.c.l.b16 %v1060
    %v1156 = vunpack.c.h.b16 %v1060
    %v1157 = vunpack.c.l.b16 %v1061
    %v1158 = vunpack.c.h.b16 %v1061
    %v1159 = vunpack.c.l.b16 %v1062
    %v1160 = vunpack.c.h.b16 %v1062
    %v1161 = vunpack.c.l.b16 %v1063
    %v1162 = vunpack.c.h.b16 %v1063
    %v1163 = vunpack.c.l.b16 %v1064
    %v1164 = vunpack.c.h.b16 %v1064
    %v1165 = vunpack.c.l.b16 %v1065
    %v1166 = vunpack.c.h.b16 %v1065
    %v1167 = vunpack.c.l.b16 %v1066
    %v1168 = vunpack.c.h.b16 %v1066
    %v1169 = vunpack.c.l.b16 %v1067
    %v1170 = vunpack.c.h.b16 %v1067
    %v1171 = vunpack.c.l.b16 %v1068
    %v1172 = vunpack.c.h.b16 %v1068
    %v1173 = vunpack.c.l.b16 %v1069
    %v1174 = vunpack.c.h.b16 %v1069
    %v1175 = vunpack.c.l.b16 %v1070
    %v1176 = vunpack.c.h.b16 %v1070
    %v1177 = vunpack.c.l.b16 %v1071
    %v1178 = vunpack.c.h.b16 %v1071
    %v1179 = vunpack.c.l.b16 %v1072
    %v1180 = vunpack.c.h.b16 %v1072
    %v1181 = vpack.c.b16 %v1119, %v1117
    %v1182 = vpack.c.b16 %v1120, %v1118
    %v1183 = vpack.c.b16 %v1123, %v1121
    %v1184 = vpack.c.b16 %v1124, %v1122
    %v1185 = vpack.c.b16 %v1127, %v1125
    %v1186 = vpack.c.b16 %v1128, %v1126
    %v1187 = vpack.c.b16 %v1131, %v1129
    %v1188 = vpack.c.b16 %v1132, %v1130
    %v1189 = vpack.c.b16 %v1135, %v1133
    %v1190 = vpack.c.b16 %v1136, %v1134
    %v1191 = vpack.c.b16 %v1139, %v1137
    %v1192 = vpack.c.b16 %v1140, %v1138
    %v1193 = vpack.c.b16 %v1143, %v1141
    %v1194 = vpack.c.b16 %v1144, %v1142
    %v1195 = vpack.c.b16 %v1147, %v1145
    %v1196 = vpack.c.b16 %v1148, %v1146
    %v1197 = vpack.c.b16 %v1151, %v1149
    %v1198 = vpack.c.b16 %v1152, %v1150
    %v1199 = vpack.c.b16 %v1155, %v1153
    %v1200 = vpack.c.b16 %v1156, %v1154
    %v1201 = vpack.c.b16 %v1159, %v1157
    %v1202 = vpack.c.b16 %v1160, %v1158
    %v1203 = vpack.c.b16 %v1163, %v1161
    %v1204 = vpack.c.b16 %v1164, %v1162
    %v1205 = vpack.c.b16 %v1167, %v1165
    %v1206 = vpack.c.b16 %v1168, %v1166
    %v1207 = vpack.c.b16 %v1171, %v1169
    %v1208 = vpack.c.b16 %v1172, %v1170
    %v1209 = vpack.c.b16 %v1175, %v1173
    %v1210 = vpack.c.b16 %v1176, %v1174
    %v1211 = vpack.c.b16 %v1179, %v1177
    %v1212 = vpack.c.b16 %v1180, %v1178
    %1245 = vmatprep.subr.bf16.mxu0 %v1182
    %1246 = vmatpush1.bf16.msra.mxu0 %v1181
    %1247 = vmatprep.subr.bf16.mxu0 %v1184
    %1248 = vmatpush1.bf16.msra.mxu0 %v1183
    %1249 = vmatprep.subr.bf16.mxu0 %v1186
    %1250 = vmatpush1.bf16.msra.mxu0 %v1185
    %1251 = vmatprep.subr.bf16.mxu0 %v1188
    %1252 = vmatpush1.bf16.msra.mxu0 %v1187
    %1253 = vmatprep.subr.bf16.mxu0 %v1190
    %1254 = vmatpush1.bf16.msra.mxu0 %v1189
    %1255 = vmatprep.subr.bf16.mxu0 %v1192
    %1256 = vmatpush1.bf16.msra.mxu0 %v1191
    %1257 = vmatprep.subr.bf16.mxu0 %v1194
    %1258 = vmatpush1.bf16.msra.mxu0 %v1193
    %1259 = vmatprep.subr.bf16.mxu0 %v1196
    %1260 = vmatpush1.bf16.msra.mxu0 %v1195
    %1261 = vmatprep.subr.bf16.mxu0 %v1198
    %1262 = vmatpush1.bf16.msra.mxu0 %v1197
    %1263 = vmatprep.subr.bf16.mxu0 %v1200
    %1264 = vmatpush1.bf16.msra.mxu0 %v1199
    %1265 = vmatprep.subr.bf16.mxu0 %v1202
    %1266 = vmatpush1.bf16.msra.mxu0 %v1201
    %1267 = vmatprep.subr.bf16.mxu0 %v1204
    %1268 = vmatpush1.bf16.msra.mxu0 %v1203
    %1269 = vmatprep.subr.bf16.mxu0 %v1206
    %1270 = vmatpush1.bf16.msra.mxu0 %v1205
    %1271 = vmatprep.subr.bf16.mxu0 %v1208
    %1272 = vmatpush1.bf16.msra.mxu0 %v1207
    %1273 = vmatprep.subr.bf16.mxu0 %v1210
    %1274 = vmatpush1.bf16.msra.mxu0 %v1209
    %1275 = vmatprep.subr.bf16.mxu0 %v1212
    %1276 = vmatpush1.bf16.msra.mxu0 %v1211
    %1277 = vmatprep.mubr.bf16.mxu0 %v1040
    %1278 = vmatmul.mubr.bf16.gmra.mrb[0].mxu0 %v1039
    %v1279 = vpop.f32.mrb[0].mxu0
    %v1280 = vadd.f32 %v1078, %v1279
    %v1281 = vpop.f32.mrb[0].mxu0
    %v1282 = vadd.f32 %v1082, %v1281
    %v1283 = vpop.f32.mrb[0].mxu0
    %v1284 = vpop.f32.mrb[0].mxu0
    %1285 = vdwg.mxu0
    %v1286 = vmax.f32 %v1280, 0.0
    %v1287 = vmax.f32 %v1282, 0.0
    %v1288 = vpack.c.bf16 %v1286, %v1286
    %v1289 = vpack.c.bf16 %v1287, %v1287
    %v1290 = vld [vmem:[#allocation10] sm:$0xff]
    %v1291 = vld [vmem:[#allocation10 + $0x8] sm:$0xff]
    %v1292 = vld [vmem:[#allocation10 + $0x10] sm:$0xff]
    %v1293 = vld [vmem:[#allocation10 + $0x18] sm:$0xff]
    %v1294 = vld [vmem:[#allocation10 + $0x20] sm:$0xff]
    %v1295 = vld [vmem:[#allocation10 + $0x28] sm:$0xff]
    %v1296 = vld [vmem:[#allocation10 + $0x30] sm:$0xff]
    %v1297 = vld [vmem:[#allocation10 + $0x38] sm:$0xff]
    %v1298 = vld [vmem:[#allocation10 + $0x40] sm:$0xff]
    %v1299 = vld [vmem:[#allocation10 + $0x48] sm:$0xff]
    %v1300 = vld [vmem:[#allocation10 + $0x50] sm:$0xff]
    %v1301 = vld [vmem:[#allocation10 + $0x58] sm:$0xff]
    %v1302 = vld [vmem:[#allocation10 + $0x60] sm:$0xff]
    %v1303 = vld [vmem:[#allocation10 + $0x68] sm:$0xff]
    %v1304 = vld [vmem:[#allocation10 + $0x70] sm:$0xff]
    %v1305 = vld [vmem:[#allocation10 + $0x78] sm:$0xff]
    %v1306 = vld [vmem:[#allocation10 + $0x80] sm:$0xff]
    %v1307 = vld [vmem:[#allocation10 + $0x88] sm:$0xff]
    %v1308 = vld [vmem:[#allocation10 + $0x90] sm:$0xff]
    %v1309 = vld [vmem:[#allocation10 + $0x98] sm:$0xff]
    %v1310 = vld [vmem:[#allocation10 + $0xa0] sm:$0xff]
    %v1311 = vld [vmem:[#allocation10 + $0xa8] sm:$0xff]
    %v1312 = vld [vmem:[#allocation10 + $0xb0] sm:$0xff]
    %v1313 = vld [vmem:[#allocation10 + $0xb8] sm:$0xff]
    %v1314 = vld [vmem:[#allocation10 + $0xc0] sm:$0xff]
    %v1315 = vld [vmem:[#allocation10 + $0xc8] sm:$0xff]
    %v1316 = vld [vmem:[#allocation10 + $0xd0] sm:$0xff]
    %v1317 = vld [vmem:[#allocation10 + $0xd8] sm:$0xff]
    %v1318 = vld [vmem:[#allocation10 + $0xe0] sm:$0xff]
    %v1319 = vld [vmem:[#allocation10 + $0xe8] sm:$0xff]
    %v1320 = vld [vmem:[#allocation10 + $0xf0] sm:$0xff]
    %v1321 = vld [vmem:[#allocation10 + $0xf8] sm:$0xff]
    %v1322 = vld [vmem:[%s14] sm:$0x3]
    %v1324 = vlaneseq
    %v1325 = vshrl.u32 %v1324, 7
    %v1326 = vsub.s32 0, %v1325
    %v1327 = vrot.slane %v1322, %v1326
    %v1328 = vlaneseq
    %v1329 = vshrl.u32 %v1328, 7
    %v1330 = vsub.s32 1, %v1329
    %v1331 = vrot.slane %v1322, %v1330
    %v1366 = vunpack.c.l.b16 %v1290
    %v1367 = vunpack.c.h.b16 %v1290
    %v1368 = vunpack.c.l.b16 %v1291
    %v1369 = vunpack.c.h.b16 %v1291
    %v1370 = vunpack.c.l.b16 %v1292
    %v1371 = vunpack.c.h.b16 %v1292
    %v1372 = vunpack.c.l.b16 %v1293
    %v1373 = vunpack.c.h.b16 %v1293
    %v1374 = vunpack.c.l.b16 %v1294
    %v1375 = vunpack.c.h.b16 %v1294
    %v1376 = vunpack.c.l.b16 %v1295
    %v1377 = vunpack.c.h.b16 %v1295
    %v1378 = vunpack.c.l.b16 %v1296
    %v1379 = vunpack.c.h.b16 %v1296
    %v1380 = vunpack.c.l.b16 %v1297
    %v1381 = vunpack.c.h.b16 %v1297
    %v1382 = vunpack.c.l.b16 %v1298
    %v1383 = vunpack.c.h.b16 %v1298
    %v1384 = vunpack.c.l.b16 %v1299
    %v1385 = vunpack.c.h.b16 %v1299
    %v1386 = vunpack.c.l.b16 %v1300
    %v1387 = vunpack.c.h.b16 %v1300
    %v1388 = vunpack.c.l.b16 %v1301
    %v1389 = vunpack.c.h.b16 %v1301
    %v1390 = vunpack.c.l.b16 %v1302
    %v1391 = vunpack.c.h.b16 %v1302
    %v1392 = vunpack.c.l.b16 %v1303
    %v1393 = vunpack.c.h.b16 %v1303
    %v1394 = vunpack.c.l.b16 %v1304
    %v1395 = vunpack.c.h.b16 %v1304
    %v1396 = vunpack.c.l.b16 %v1305
    %v1397 = vunpack.c.h.b16 %v1305
    %v1398 = vunpack.c.l.b16 %v1306
    %v1399 = vunpack.c.h.b16 %v1306
    %v1400 = vunpack.c.l.b16 %v1307
    %v1401 = vunpack.c.h.b16 %v1307
    %v1402 = vunpack.c.l.b16 %v1308
    %v1403 = vunpack.c.h.b16 %v1308
    %v1404 = vunpack.c.l.b16 %v1309
    %v1405 = vunpack.c.h.b16 %v1309
    %v1406 = vunpack.c.l.b16 %v1310
    %v1407 = vunpack.c.h.b16 %v1310
    %v1408 = vunpack.c.l.b16 %v1311
    %v1409 = vunpack.c.h.b16 %v1311
    %v1410 = vunpack.c.l.b16 %v1312
    %v1411 = vunpack.c.h.b16 %v1312
    %v1412 = vunpack.c.l.b16 %v1313
    %v1413 = vunpack.c.h.b16 %v1313
    %v1414 = vunpack.c.l.b16 %v1314
    %v1415 = vunpack.c.h.b16 %v1314
    %v1416 = vunpack.c.l.b16 %v1315
    %v1417 = vunpack.c.h.b16 %v1315
    %v1418 = vunpack.c.l.b16 %v1316
    %v1419 = vunpack.c.h.b16 %v1316
    %v1420 = vunpack.c.l.b16 %v1317
    %v1421 = vunpack.c.h.b16 %v1317
    %v1422 = vunpack.c.l.b16 %v1318
    %v1423 = vunpack.c.h.b16 %v1318
    %v1424 = vunpack.c.l.b16 %v1319
    %v1425 = vunpack.c.h.b16 %v1319
    %v1426 = vunpack.c.l.b16 %v1320
    %v1427 = vunpack.c.h.b16 %v1320
    %v1428 = vunpack.c.l.b16 %v1321
    %v1429 = vunpack.c.h.b16 %v1321
    %v1430 = vpack.c.b16 %v1368, %v1366
    %v1431 = vpack.c.b16 %v1369, %v1367
    %v1432 = vpack.c.b16 %v1372, %v1370
    %v1433 = vpack.c.b16 %v1373, %v1371
    %v1434 = vpack.c.b16 %v1376, %v1374
    %v1435 = vpack.c.b16 %v1377, %v1375
    %v1436 = vpack.c.b16 %v1380, %v1378
    %v1437 = vpack.c.b16 %v1381, %v1379
    %v1438 = vpack.c.b16 %v1384, %v1382
    %v1439 = vpack.c.b16 %v1385, %v1383
    %v1440 = vpack.c.b16 %v1388, %v1386
    %v1441 = vpack.c.b16 %v1389, %v1387
    %v1442 = vpack.c.b16 %v1392, %v1390
    %v1443 = vpack.c.b16 %v1393, %v1391
    %v1444 = vpack.c.b16 %v1396, %v1394
    %v1445 = vpack.c.b16 %v1397, %v1395
    %v1446 = vpack.c.b16 %v1400, %v1398
    %v1447 = vpack.c.b16 %v1401, %v1399
    %v1448 = vpack.c.b16 %v1404, %v1402
    %v1449 = vpack.c.b16 %v1405, %v1403
    %v1450 = vpack.c.b16 %v1408, %v1406
    %v1451 = vpack.c.b16 %v1409, %v1407
    %v1452 = vpack.c.b16 %v1412, %v1410
    %v1453 = vpack.c.b16 %v1413, %v1411
    %v1454 = vpack.c.b16 %v1416, %v1414
    %v1455 = vpack.c.b16 %v1417, %v1415
    %v1456 = vpack.c.b16 %v1420, %v1418
    %v1457 = vpack.c.b16 %v1421, %v1419
    %v1458 = vpack.c.b16 %v1424, %v1422
    %v1459 = vpack.c.b16 %v1425, %v1423
    %v1460 = vpack.c.b16 %v1428, %v1426
    %v1461 = vpack.c.b16 %v1429, %v1427
    %1494 = vmatprep.subr.bf16.mxu0 %v1431
    %1495 = vmatpush1.bf16.msra.mxu0 %v1430
    %1496 = vmatprep.subr.bf16.mxu0 %v1433
    %1497 = vmatpush1.bf16.msra.mxu0 %v1432
    %1498 = vmatprep.subr.bf16.mxu0 %v1435
    %1499 = vmatpush1.bf16.msra.mxu0 %v1434
    %1500 = vmatprep.subr.bf16.mxu0 %v1437
    %1501 = vmatpush1.bf16.msra.mxu0 %v1436
    %1502 = vmatprep.subr.bf16.mxu0 %v1439
    %1503 = vmatpush1.bf16.msra.mxu0 %v1438
    %1504 = vmatprep.subr.bf16.mxu0 %v1441
    %1505 = vmatpush1.bf16.msra.mxu0 %v1440
    %1506 = vmatprep.subr.bf16.mxu0 %v1443
    %1507 = vmatpush1.bf16.msra.mxu0 %v1442
    %1508 = vmatprep.subr.bf16.mxu0 %v1445
    %1509 = vmatpush1.bf16.msra.mxu0 %v1444
    %1510 = vmatprep.subr.bf16.mxu0 %v1447
    %1511 = vmatpush1.bf16.msra.mxu0 %v1446
    %1512 = vmatprep.subr.bf16.mxu0 %v1449
    %1513 = vmatpush1.bf16.msra.mxu0 %v1448
    %1514 = vmatprep.subr.bf16.mxu0 %v1451
    %1515 = vmatpush1.bf16.msra.mxu0 %v1450
    %1516 = vmatprep.subr.bf16.mxu0 %v1453
    %1517 = vmatpush1.bf16.msra.mxu0 %v1452
    %1518 = vmatprep.subr.bf16.mxu0 %v1455
    %1519 = vmatpush1.bf16.msra.mxu0 %v1454
    %1520 = vmatprep.subr.bf16.mxu0 %v1457
    %1521 = vmatpush1.bf16.msra.mxu0 %v1456
    %1522 = vmatprep.subr.bf16.mxu0 %v1459
    %1523 = vmatpush1.bf16.msra.mxu0 %v1458
    %1524 = vmatprep.subr.bf16.mxu0 %v1461
    %1525 = vmatpush1.bf16.msra.mxu0 %v1460
    %1526 = vmatprep.mubr.bf16.mxu0 %v1289
    %1527 = vmatmul.mubr.bf16.gmra.mrb[0].mxu0 %v1288
    %v1528 = vpop.f32.mrb[0].mxu0
    %v1529 = vadd.f32 %v1327, %v1528
    %v1530 = vpop.f32.mrb[0].mxu0
    %v1531 = vadd.f32 %v1331, %v1530
    %v1532 = vpop.f32.mrb[0].mxu0
    %v1533 = vpop.f32.mrb[0].mxu0
    %1534 = vdwg.mxu0
    %v1535 = vmax.f32 %v1529, 0.0
    %v1536 = vmax.f32 %v1531, 0.0
    %v1537 = vpack.c.bf16 %v1535, %v1535
    %v1538 = vpack.c.bf16 %v1536, %v1536
    %v1539 = vld [vmem:[%s15] sm:$0xf]
    %v1540 = vld [vmem:[%s15 + $0x4] sm:$0xf]
    %v1541 = vld [vmem:[%s15 + $0x8] sm:$0xf]
    %v1542 = vld [vmem:[%s15 + $0xc] sm:$0xf]
    %v1543 = vld [vmem:[%s15 + $0x10] sm:$0xf]
    %v1544 = vld [vmem:[%s15 + $0x14] sm:$0xf]
    %v1545 = vld [vmem:[%s15 + $0x18] sm:$0xf]
    %v1546 = vld [vmem:[%s15 + $0x1c] sm:$0xf]
    %v1547 = vld [vmem:[%s15 + $0x20] sm:$0xf]
    %v1548 = vld [vmem:[%s15 + $0x24] sm:$0xf]
    %v1549 = vld [vmem:[%s15 + $0x28] sm:$0xf]
    %v1550 = vld [vmem:[%s15 + $0x2c] sm:$0xf]
    %v1551 = vld [vmem:[%s15 + $0x30] sm:$0xf]
    %v1552 = vld [vmem:[%s15 + $0x34] sm:$0xf]
    %v1553 = vld [vmem:[%s15 + $0x38] sm:$0xf]
    %v1554 = vld [vmem:[%s15 + $0x3c] sm:$0xf]
    %v1555 = vld [vmem:[%s15 + $0x40] sm:$0xf]
    %v1556 = vld [vmem:[%s15 + $0x44] sm:$0xf]
    %v1557 = vld [vmem:[%s15 + $0x48] sm:$0xf]
    %v1558 = vld [vmem:[%s15 + $0x4c] sm:$0xf]
    %v1559 = vld [vmem:[%s15 + $0x50] sm:$0xf]
    %v1560 = vld [vmem:[%s15 + $0x54] sm:$0xf]
    %v1561 = vld [vmem:[%s15 + $0x58] sm:$0xf]
    %v1562 = vld [vmem:[%s15 + $0x5c] sm:$0xf]
    %v1563 = vld [vmem:[%s15 + $0x60] sm:$0xf]
    %v1564 = vld [vmem:[%s15 + $0x64] sm:$0xf]
    %v1565 = vld [vmem:[%s15 + $0x68] sm:$0xf]
    %v1566 = vld [vmem:[%s15 + $0x6c] sm:$0xf]
    %v1567 = vld [vmem:[%s15 + $0x70] sm:$0xf]
    %v1568 = vld [vmem:[%s15 + $0x74] sm:$0xf]
    %v1569 = vld [vmem:[%s15 + $0x78] sm:$0xf]
    %v1570 = vld [vmem:[%s15 + $0x7c] sm:$0xf]
    %v1571 = vld [vmem:[%s16] sm:$0x1]
    %v1573 = vlaneseq
    %v1574 = vshrl.u32 %v1573, 7
    %v1575 = vsub.s32 0, %v1574
    %v1576 = vrot.slane %v1571, %v1575
    %v1610 = vunpack.c.l.b16 %v1539
    %v1611 = vunpack.c.l.b16 %v1540
    %v1612 = vunpack.c.l.b16 %v1541
    %v1613 = vunpack.c.l.b16 %v1542
    %v1614 = vunpack.c.l.b16 %v1543
    %v1615 = vunpack.c.l.b16 %v1544
    %v1616 = vunpack.c.l.b16 %v1545
    %v1617 = vunpack.c.l.b16 %v1546
    %v1618 = vunpack.c.l.b16 %v1547
    %v1619 = vunpack.c.l.b16 %v1548
    %v1620 = vunpack.c.l.b16 %v1549
    %v1621 = vunpack.c.l.b16 %v1550
    %v1622 = vunpack.c.l.b16 %v1551
    %v1623 = vunpack.c.l.b16 %v1552
    %v1624 = vunpack.c.l.b16 %v1553
    %v1625 = vunpack.c.l.b16 %v1554
    %v1626 = vunpack.c.l.b16 %v1555
    %v1627 = vunpack.c.l.b16 %v1556
    %v1628 = vunpack.c.l.b16 %v1557
    %v1629 = vunpack.c.l.b16 %v1558
    %v1630 = vunpack.c.l.b16 %v1559
    %v1631 = vunpack.c.l.b16 %v1560
    %v1632 = vunpack.c.l.b16 %v1561
    %v1633 = vunpack.c.l.b16 %v1562
    %v1634 = vunpack.c.l.b16 %v1563
    %v1635 = vunpack.c.l.b16 %v1564
    %v1636 = vunpack.c.l.b16 %v1565
    %v1637 = vunpack.c.l.b16 %v1566
    %v1638 = vunpack.c.l.b16 %v1567
    %v1639 = vunpack.c.l.b16 %v1568
    %v1640 = vunpack.c.l.b16 %v1569
    %v1641 = vunpack.c.l.b16 %v1570
    %v1642 = vpack.c.b16 %v1611, %v1610
    %v1643 = vpack.c.b16 %v1613, %v1612
    %v1644 = vpack.c.b16 %v1615, %v1614
    %v1645 = vpack.c.b16 %v1617, %v1616
    %v1646 = vpack.c.b16 %v1619, %v1618
    %v1647 = vpack.c.b16 %v1621, %v1620
    %v1648 = vpack.c.b16 %v1623, %v1622
    %v1649 = vpack.c.b16 %v1625, %v1624
    %v1650 = vpack.c.b16 %v1627, %v1626
    %v1651 = vpack.c.b16 %v1629, %v1628
    %v1652 = vpack.c.b16 %v1631, %v1630
    %v1653 = vpack.c.b16 %v1633, %v1632
    %v1654 = vpack.c.b16 %v1635, %v1634
    %v1655 = vpack.c.b16 %v1637, %v1636
    %v1656 = vpack.c.b16 %v1639, %v1638
    %v1657 = vpack.c.b16 %v1641, %v1640
    %1674 = vmatprep.subr.bf16.mxu0 0
    %1675 = vmatpush1.bf16.msra.mxu0 %v1642
    %1676 = vmatprep.subr.bf16.mxu0 0
    %1677 = vmatpush1.bf16.msra.mxu0 %v1643
    %1678 = vmatprep.subr.bf16.mxu0 0
    %1679 = vmatpush1.bf16.msra.mxu0 %v1644
    %1680 = vmatprep.subr.bf16.mxu0 0
    %1681 = vmatpush1.bf16.msra.mxu0 %v1645
    %1682 = vmatprep.subr.bf16.mxu0 0
    %1683 = vmatpush1.bf16.msra.mxu0 %v1646
    %1684 = vmatprep.subr.bf16.mxu0 0
    %1685 = vmatpush1.bf16.msra.mxu0 %v1647
    %1686 = vmatprep.subr.bf16.mxu0 0
    %1687 = vmatpush1.bf16.msra.mxu0 %v1648
    %1688 = vmatprep.subr.bf16.mxu0 0
    %1689 = vmatpush1.bf16.msra.mxu0 %v1649
    %1690 = vmatprep.subr.bf16.mxu0 0
    %1691 = vmatpush1.bf16.msra.mxu0 %v1650
    %1692 = vmatprep.subr.bf16.mxu0 0
    %1693 = vmatpush1.bf16.msra.mxu0 %v1651
    %1694 = vmatprep.subr.bf16.mxu0 0
    %1695 = vmatpush1.bf16.msra.mxu0 %v1652
    %1696 = vmatprep.subr.bf16.mxu0 0
    %1697 = vmatpush1.bf16.msra.mxu0 %v1653
    %1698 = vmatprep.subr.bf16.mxu0 0
    %1699 = vmatpush1.bf16.msra.mxu0 %v1654
    %1700 = vmatprep.subr.bf16.mxu0 0
    %1701 = vmatpush1.bf16.msra.mxu0 %v1655
    %1702 = vmatprep.subr.bf16.mxu0 0
    %1703 = vmatpush1.bf16.msra.mxu0 %v1656
    %1704 = vmatprep.subr.bf16.mxu0 0
    %1705 = vmatpush1.bf16.msra.mxu0 %v1657
    %1706 = vmatprep.mubr.bf16.mxu0 %v1538
    %1707 = vmatmul.mubr.bf16.gmra.mrb[0].mxu0 %v1537
    %v1708 = vpop.f32.mrb[0].mxu0
    %v1709 = vadd.f32 %v1576, %v1708
    %v1710 = vpop.f32.mrb[0].mxu0
    %v1711 = vpop.f32.mrb[0].mxu0
    %v1712 = vpop.f32.mrb[0].mxu0
    %1713 = vdwg.mxu0
    %v1714 = vtanh.pop %v1709
    %1715 = vst.msk [vmem:[#allocation11] sm:$0xff] %vm164, %v1714
    // Predicated region
    $region90: #{tpu_custom_call.1} parent=1 // pred_check
      _
    $region91: #{tpu_custom_call.1} parent=1 // pred_check_branch
      %1717 = sbr.rel (0) target = $region93
    $region92: #{tpu_custom_call.1} parent=1 // pred_region
      %s1719 = ssub.s32 128, 128
      %1720 = vsyncadd [#allocation4], %s1719
      %s1722 = sshll.u32 [#allocation11], 4
      %s1723 = int_to_ptr.vmem [resolvable:$true] %s1722
      %1725 = dma.vmem_to_hbm [thread:$0]  %s1723, 128, %s17, [#allocation4]
    $region93: #{tpu_custom_call.1} parent=1 // pred_fallthru
      _
    // Predicated region
    $region94: #{tpu_custom_call.1} parent=1 // pred_check
      _
    $region95: #{tpu_custom_call.1} parent=1 // pred_check_branch
      %1727 = sbr.rel (0) target = $region97
    $region96: #{tpu_custom_call.1} parent=1 // pred_region
      %1728 = dma.done [#allocation4], 128
    $region97: #{tpu_custom_call.1} parent=1 // pred_fallthru
      _
    %1729 = vsyncpa [#allocation3], 1
    %1730 = vsyncpa [#allocation6], 1
    %1731 = vsyncpa [#allocation9], 1
    %1732 = vsyncpa [#allocation4], 1

</llo_original>
